<compile_context>
chip_gen: v7x
topology: tpu7x:2x2x1
jax: 0.10.0
libtpu: 0.0.40
codegen_flags: <defaults>
</compile_context>

<pallas_src>
import functools

import jax
import jax.numpy as jnp
from jax.experimental import pallas as pl
from jax.experimental.pallas import tpu as pltpu


def _mlp_kernel(x_ref, w1_ref, b1_ref, w2_ref, b2_ref, o_ref):
    """out_tile = sigmoid(relu(x @ W1 + b1) @ W2[:, tile] + b2[tile]).

    fc1 (~130 KFLOP) is recomputed per grid step so there is no cross-step state and the grid
    axis can be marked 'parallel' (megacore-safe).
    """
    x = x_ref[...].astype(jnp.bfloat16)
    h = jnp.dot(x, w1_ref[...], preferred_element_type=jnp.float32)
    h = jnp.maximum(h + b1_ref[...], 0.0)                       # (B, hidden), ReLU, f32
    y = jnp.dot(h.astype(jnp.bfloat16), w2_ref[...],
                preferred_element_type=jnp.float32)
    o_ref[...] = jax.nn.sigmoid(y + b2_ref[...])                # (B, tile_n), f32


def _num_tensorcores():
    """Best-effort TensorCores-per-chip (2 on v7x). Any failure falls back to 1,
    which keeps grid=(1,) — the right choice on single-TC v5e/v6e."""
    try:
        dev = jax.devices()[0]
        kind = (getattr(dev, "device_kind", "") or "").lower()
        if "v7" in kind:
            return 2
        n = getattr(dev, "num_cores", None)
        if isinstance(n, int) and n > 0:
            return n
    except Exception:
        pass
    return 1


def _pick_tile_n(hidden, out_feats, num_tc, budget_bytes=6 * 1024 * 1024):
    """Output-column tile width.

    Multi-TC (v7x): prefer out_feats / num_tc so the parallel grid axis shards the dominant
    W2 stream across cores. Single-TC: collapse to the full width (grid=(1,)) — extra grid
    steps are pure overhead when compute per tile is ~10 ns. Always a multiple of 128 and a
    divisor of out_feats; the double-buffered bf16 W2 tile must fit the VMEM budget.
    """
    if num_tc > 1 and out_feats % (128 * num_tc) == 0:
        cap = out_feats // num_tc
    else:
        cap = out_feats
    best = None
    t = 128
    while t <= cap:
        if out_feats % t == 0 and 2 * hidden * t * 2 <= budget_bytes:
            best = t
        t += 128
    if best is None:
        # Even a 128-wide double-buffered bf16 W2 tile exceeds the budget (hidden > ~16K).
        # Fall back to 128 and accept the overshoot rather than failing.
        best = 128
    return best


@functools.partial(jax.jit, static_argnames=("num_tc",))
def _forward_impl(latent, w1_bf, b1_2d, w2_bf, b2_2d, *, num_tc):
    B, latent_dim = latent.shape
    hidden, out_feats = w2_bf.shape

    tile_n = _pick_tile_n(hidden, out_feats, num_tc)
    n_tiles = out_feats // tile_n

    cost = pl.CostEstimate(
        flops=2 * B * (latent_dim * hidden * n_tiles + hidden * out_feats),
        transcendentals=B * out_feats,                           # sigmoid
        bytes_accessed=(latent.size * 4 + w1_bf.size * 2 + w2_bf.size * 2
                        + b1_2d.size * 4 + b2_2d.size * 4 + B * out_feats * 4),
    )

    return pl.pallas_call(
        _mlp_kernel,
        out_shape=jax.ShapeDtypeStruct((B, out_feats), jnp.float32),
        grid_spec=pltpu.PrefetchScalarGridSpec(
            num_scalar_prefetch=0,
            grid=(n_tiles,),
            in_specs=[
                pl.BlockSpec((B, latent_dim), lambda j: (0, 0)),       # latent (full; B rows ok)
                pl.BlockSpec((latent_dim, hidden), lambda j: (0, 0)),  # W1 (full, bf16)
                pl.BlockSpec((1, hidden), lambda j: (0, 0)),           # b1 (full)
                pl.BlockSpec((hidden, tile_n), lambda j: (0, j)),      # W2 column tile (bf16)
                pl.BlockSpec((1, tile_n), lambda j: (0, j)),           # b2 tile
            ],
            out_specs=pl.BlockSpec((B, tile_n), lambda j: (0, j)),     # lane-dense output tile
        ),
        compiler_params=pltpu.CompilerParams(
            dimension_semantics=("parallel",),      # no cross-step state -> megacore-safe
            vmem_limit_bytes=8 * 1024 * 1024,       # actual footprint ~2.5 MiB; v7x-safe
        ),
        cost_estimate=cost,
    )(latent, w1_bf, b1_2d, w2_bf, b2_2d)


def simple_diffusion_forward(latent, w1_bf, b1_2d, w2_bf, b2_2d):
    """Pallas implementation of SimpleDiffusionModel.forward.

    latent: (B, latent_dim) f32
    w1_bf:  (latent_dim, hidden) bf16   (pre-transposed vs. nn.Linear.weight, stored bf16)
    b1_2d:  (1, hidden) f32
    w2_bf:  (hidden, out_feats) bf16
    b2_2d:  (1, out_feats) f32
    returns (B, out_feats) f32
    """
    hidden, out_feats = w2_bf.shape
    assert w1_bf.shape[1] == hidden
    assert out_feats % 128 == 0, "out_features must be a multiple of 128"
    return _forward_impl(latent, w1_bf, b1_2d, w2_bf, b2_2d, num_tc=_num_tensorcores())


def init_params(key, latent_dim, hidden, out_feats):
    """Deterministic PyTorch-style (uniform +/- 1/sqrt(fan_in)) init.

    Weights are pre-transposed and stored bf16 ONCE here (not per forward call); biases are
    pre-shaped to (1, N) f32. Returns (f32 copies for reference, kernel-ready params).
    """
    k1, k2, k3, k4 = jax.random.split(key, 4)
    bound1 = 1.0 / (latent_dim ** 0.5)
    bound2 = 1.0 / (hidden ** 0.5)
    w1 = jax.random.uniform(k1, (latent_dim, hidden), jnp.float32, -bound1, bound1)
    b1 = jax.random.uniform(k2, (hidden,), jnp.float32, -bound1, bound1)
    w2 = jax.random.uniform(k3, (hidden, out_feats), jnp.float32, -bound2, bound2)
    b2 = jax.random.uniform(k4, (out_feats,), jnp.float32, -bound2, bound2)
    kernel_params = (w1.astype(jnp.bfloat16), b1.reshape(1, hidden),
                     w2.astype(jnp.bfloat16), b2.reshape(1, out_feats))
    return (w1, b1, w2, b2), kernel_params


if __name__ == "__main__":
    # Small shapes consistent with the module: latent_dim=64, hidden=512, spec_shape=(32, 32).
    batch = 2
    latent_dim = 64
    hidden = 512
    spec_shape = (32, 32)
    out_feats = spec_shape[0] * spec_shape[1]  # 1024

    key = jax.random.PRNGKey(0)
    k_in, k_params = jax.random.split(key)
    latent = jax.random.normal(k_in, (batch, latent_dim), jnp.float32)
    (w1, b1, w2, b2), (w1_bf, b1_2d, w2_bf, b2_2d) = init_params(
        k_params, latent_dim, hidden, out_feats)

    out = simple_diffusion_forward(latent, w1_bf, b1_2d, w2_bf, b2_2d)
    out = jax.block_until_ready(out)

    # Pure-JAX f32 reference. The kernel streams bf16 weights and casts the hidden activation
    # to bf16 before fc2 (f32 MXU accumulation), so compare with a modest tolerance; sigmoid
    # bounds outputs to [0, 1].
    h_ref = jnp.maximum(latent @ w1 + b1, 0.0)
    ref = jax.nn.sigmoid(h_ref @ w2 + b2)
    assert out.shape == (batch, out_feats)
    assert jnp.allclose(out, ref, atol=2e-2, rtol=0.0), float(jnp.abs(out - ref).max())

    print("KERNEL_OK")
</pallas_src>

<mosaic_0001>
module attributes {stable_mosaic.version = 11 : i64} {
  func.func @_mlp_kernel(%arg0: i32, %arg1: memref<2x64xf32, #tpu.memory_space<vmem>>, %arg2: memref<64x512xbf16, #tpu.memory_space<vmem>>, %arg3: memref<1x512xf32, #tpu.memory_space<vmem>>, %arg4: memref<512x1024xbf16, #tpu.memory_space<vmem>>, %arg5: memref<1x1024xf32, #tpu.memory_space<vmem>>, %arg6: memref<2x1024xf32, #tpu.memory_space<vmem>>) attributes {dimension_semantics = [#tpu.dimension_semantics<parallel>], iteration_bounds = array<i64: 1>, scalar_prefetch = 0 : i64, scratch_operands = 0 : i64, tpu.core_type = #tpu.core_type<tc>, window_params = [{pipeline_mode = #tpu.pipeline_mode<synchronous>, transform_indices = @transform_0, window_bounds = array<i64: 2, 64>}, {pipeline_mode = #tpu.pipeline_mode<synchronous>, transform_indices = @transform_1, window_bounds = array<i64: 64, 512>}, {pipeline_mode = #tpu.pipeline_mode<synchronous>, transform_indices = @transform_2, window_bounds = array<i64: 1, 512>}, {transform_indices = @transform_3, window_bounds = array<i64: 512, 1024>}, {transform_indices = @transform_4, window_bounds = array<i64: 1, 1024>}, {transform_indices = @transform_5, window_bounds = array<i64: 2, 1024>}]} {
    %c0 = arith.constant 0 : index
    %c0_0 = arith.constant 0 : index
    %0 = vector.load %arg1[%c0, %c0_0] : memref<2x64xf32, #tpu.memory_space<vmem>>, vector<2x64xf32>
    %1 = arith.truncf %0 : vector<2x64xf32> to vector<2x64xbf16>
    %c0_1 = arith.constant 0 : index
    %c0_2 = arith.constant 0 : index
    %2 = vector.load %arg2[%c0_1, %c0_2] : memref<64x512xbf16, #tpu.memory_space<vmem>>, vector<64x512xbf16>
    %cst = arith.constant dense<0.000000e+00> : vector<2x512xf32>
    %3 = tpu.matmul %1, %2, %cst {dimension_numbers = #tpu.dot_dimension_numbers<[1], [0], [0], [1], [0, 0, 1, 1], [], []>} : vector<2x64xbf16>, vector<64x512xbf16>, vector<2x512xf32> -> vector<2x512xf32>
    %c0_3 = arith.constant 0 : index
    %c0_4 = arith.constant 0 : index
    %4 = vector.load %arg3[%c0_3, %c0_4] : memref<1x512xf32, #tpu.memory_space<vmem>>, vector<1x512xf32>
    %5 = vector.broadcast %4 : vector<1x512xf32> to vector<2x512xf32>
    %6 = arith.addf %3, %5 : vector<2x512xf32>
    %cst_5 = arith.constant 0.000000e+00 : f32
    %7 = vector.broadcast %cst_5 : f32 to vector<2x512xf32>
    %8 = arith.maximumf %6, %7 : vector<2x512xf32>
    %9 = arith.truncf %8 : vector<2x512xf32> to vector<2x512xbf16>
    %c0_6 = arith.constant 0 : index
    %c0_7 = arith.constant 0 : index
    %10 = vector.load %arg4[%c0_6, %c0_7] : memref<512x1024xbf16, #tpu.memory_space<vmem>>, vector<512x1024xbf16>
    %cst_8 = arith.constant dense<0.000000e+00> : vector<2x1024xf32>
    %11 = tpu.matmul %9, %10, %cst_8 {dimension_numbers = #tpu.dot_dimension_numbers<[1], [0], [0], [1], [0, 0, 1, 1], [], []>} : vector<2x512xbf16>, vector<512x1024xbf16>, vector<2x1024xf32> -> vector<2x1024xf32>
    %c0_9 = arith.constant 0 : index
    %c0_10 = arith.constant 0 : index
    %12 = vector.load %arg5[%c0_9, %c0_10] : memref<1x1024xf32, #tpu.memory_space<vmem>>, vector<1x1024xf32>
    %13 = vector.broadcast %12 : vector<1x1024xf32> to vector<2x1024xf32>
    %14 = arith.addf %11, %13 : vector<2x1024xf32>
    %15 = arith.negf %14 : vector<2x1024xf32>
    %16 = math.exp %15 : vector<2x1024xf32>
    %cst_11 = arith.constant 1.000000e+00 : f32
    %17 = vector.broadcast %cst_11 : f32 to vector<2x1024xf32>
    %18 = arith.addf %17, %16 : vector<2x1024xf32>
    %19 = arith.divf %17, %18 : vector<2x1024xf32>
    %c0_12 = arith.constant 0 : index
    %c0_13 = arith.constant 0 : index
    %20 = vector.load %arg6[%c0_12, %c0_13] : memref<2x1024xf32, #tpu.memory_space<vmem>>, vector<2x1024xf32>
    tpu.vector_store %arg6[%c0_12, %c0_13], %19 {strides = array<i32>} : memref<2x1024xf32, #tpu.memory_space<vmem>>, vector<2x1024xf32>,
    return
  }
  func.func @transform_0(%arg0: i32) -> (i32, i32) {
    %c0_i32 = arith.constant 0 : i32
    %c0_i32_0 = arith.constant 0 : i32
    %c0_i32_1 = arith.constant 0 : i32
    return %c0_i32, %c0_i32_0 : i32, i32
  }
  func.func @transform_1(%arg0: i32) -> (i32, i32) {
    %c0_i32 = arith.constant 0 : i32
    %c0_i32_0 = arith.constant 0 : i32
    %c0_i32_1 = arith.constant 0 : i32
    return %c0_i32, %c0_i32_0 : i32, i32
  }
  func.func @transform_2(%arg0: i32) -> (i32, i32) {
    %c0_i32 = arith.constant 0 : i32
    %c0_i32_0 = arith.constant 0 : i32
    %c0_i32_1 = arith.constant 0 : i32
    return %c0_i32, %c0_i32_0 : i32, i32
  }
  func.func @transform_3(%arg0: i32) -> (i32, i32) {
    %c0_i32 = arith.constant 0 : i32
    %c0_i32_0 = arith.constant 0 : i32
    return %c0_i32, %arg0 : i32, i32
  }
  func.func @transform_4(%arg0: i32) -> (i32, i32) {
    %c0_i32 = arith.constant 0 : i32
    %c0_i32_0 = arith.constant 0 : i32
    return %c0_i32, %arg0 : i32, i32
  }
  func.func @transform_5(%arg0: i32) -> (i32, i32) {
    %c0_i32 = arith.constant 0 : i32
    %c0_i32_0 = arith.constant 0 : i32
    return %c0_i32, %arg0 : i32, i32
  }
}

</mosaic_0001>

<llo_original>
// kernel: _forward_impl.1
$region0: #{_forward_impl.1}
  #allocation0 [shape = 'u32[]', space=smem, size = 0x4, offset = 0x4, fixed_abs, tag = 'smem constant byte address 0x4 - core index']
  #allocation1 [shape = 'u32[144,128]{1,0:T(1,128)}', space=vmem, size = 0x12000, scoped, tag = 'internal scratch']
  %s0 = inlined_call_operand.hbm [shape: f32[2,64], index: 0, kind: input, shape index: {}]
  %s1 = inlined_call_operand.hbm [shape: bf16[64,512], index: 1, kind: input, shape index: {}]
  %s2 = inlined_call_operand.vmem [shape: f32[1,512], index: 2, kind: input, shape index: {}]
  %s3 = inlined_call_operand.hbm [shape: bf16[512,1024], index: 3, kind: input, shape index: {}]
  %s4 = inlined_call_operand.vmem [shape: f32[1,1024], index: 4, kind: input, shape index: {}]
  %s5 = inlined_call_operand.hbm [shape: f32[2,1024], index: 5, kind: output, shape index: {}]
  %s6 = sld [smem:[#allocation0]]
  $region42: #{_forward_impl.1} parent=0
    _
  %s8 = ssub.s32 1, %s6
  %s9 = scalar_select 0, %s8, %s6
  $region1: #{_forward_impl.1} parent=0
    #allocation2 [shape = 'u8[1024]{0}', space=vmem, size = 0x400, scoped, tag = 'input window, operand 0, single buffered']
    #allocation3 [shape = 's32[1]{0}', space=sflag, size = 0x4, scoped, tag = 'scoped memory for _forward_impl.1']
    #allocation4 [shape = 's32[1]{0}', space=sflag, size = 0x4, scoped, tag = 'scoped memory for _forward_impl.1']
    #allocation5 [shape = 'u8[65536]{0}', space=vmem, size = 0x10000, scoped, tag = 'input window, operand 1, single buffered']
    #allocation6 [shape = 's32[1]{0}', space=sflag, size = 0x4, scoped, tag = 'scoped memory for _forward_impl.1']
    #allocation7 [shape = 'u8[1048576]{0}', space=vmem, size = 0x100000, scoped, tag = 'input window, operand 3, single buffered']
    #allocation8 [shape = 'u8[8192]{0}', space=vmem, size = 0x2000, scoped, tag = 'output window, operand 0, single buffered']
    %10 = vsyncpa [#allocation3], 0
    %11 = vsyncpa [#allocation6], 0
    %12 = vsyncpa [#allocation4], 0
    // Predicated region
    $region2: #{_forward_impl.1} parent=1 // pred_check
      _
    $region3: #{_forward_impl.1} parent=1 // pred_check_branch
      %14 = sbr.rel (0) target = $region5
    $region4: #{_forward_impl.1} parent=1 // pred_region
      %s16 = ssub.s32 32, 32
      %17 = vsyncadd [#allocation3], %s16
      %s19 = sshll.u32 [#allocation2], 4
      %s20 = int_to_ptr.vmem [resolvable:$true] %s19
      %22 = dma.hbm_to_vmem [thread:$0]  %s0, 32, %s20, [#allocation3]
    $region5: #{_forward_impl.1} parent=1 // pred_fallthru
      _
    // Predicated region
    $region6: #{_forward_impl.1} parent=1 // pred_check
      _
    $region7: #{_forward_impl.1} parent=1 // pred_check_branch
      %24 = sbr.rel (0) target = $region9
    $region8: #{_forward_impl.1} parent=1 // pred_region
      %s26 = ssub.s32 2048, 2048
      %27 = vsyncadd [#allocation6], %s26
      %s28 = sshll.u32 [#allocation5], 4
      %s29 = int_to_ptr.vmem [resolvable:$true] %s28
      %34 = dma.hbm_to_vmem [thread:$0]  %s1, 2048, %s29, [#allocation6], 256, 256, 16
    $region9: #{_forward_impl.1} parent=1 // pred_fallthru
      _
    // Predicated region
    $region10: #{_forward_impl.1} parent=1 // pred_check
      _
    $region11: #{_forward_impl.1} parent=1 // pred_check_branch
      %36 = sbr.rel (0) target = $region13
    $region12: #{_forward_impl.1} parent=1 // pred_region
      _
    $region13: #{_forward_impl.1} parent=1 // pred_fallthru
      _
    // Predicated region
    $region14: #{_forward_impl.1} parent=1 // pred_check
      _
    $region15: #{_forward_impl.1} parent=1 // pred_check_branch
      %38 = sbr.rel (0) target = $region17
    $region16: #{_forward_impl.1} parent=1 // pred_region
      %s40 = ssub.s32 32768, 32768
      %41 = vsyncadd [#allocation6], %s40
      %s42 = sshll.u32 [#allocation7], 4
      %s43 = int_to_ptr.vmem [resolvable:$true] %s42
      %48 = dma.hbm_to_vmem [thread:$0]  %s3, 32768, %s43, [#allocation6], 512, 512, 32
    $region17: #{_forward_impl.1} parent=1 // pred_fallthru
      _
    // Predicated region
    $region18: #{_forward_impl.1} parent=1 // pred_check
      _
    $region19: #{_forward_impl.1} parent=1 // pred_check_branch
      %50 = sbr.rel (0) target = $region21
    $region20: #{_forward_impl.1} parent=1 // pred_region
      _
    $region21: #{_forward_impl.1} parent=1 // pred_fallthru
      _
    // Predicated region
    $region22: #{_forward_impl.1} parent=1 // pred_check
      _
    $region23: #{_forward_impl.1} parent=1 // pred_check_branch
      %52 = sbr.rel (0) target = $region25
    $region24: #{_forward_impl.1} parent=1 // pred_region
      %53 = dma.done [#allocation3], 32
    $region25: #{_forward_impl.1} parent=1 // pred_fallthru
      _
    // Predicated region
    $region26: #{_forward_impl.1} parent=1 // pred_check
      _
    $region27: #{_forward_impl.1} parent=1 // pred_check_branch
      %55 = sbr.rel (0) target = $region29
    $region28: #{_forward_impl.1} parent=1 // pred_region
      %56 = dma.done [#allocation6], 2048
    $region29: #{_forward_impl.1} parent=1 // pred_fallthru
      _
    // Predicated region
    $region30: #{_forward_impl.1} parent=1 // pred_check
      _
    $region31: #{_forward_impl.1} parent=1 // pred_check_branch
      %58 = sbr.rel (0) target = $region33
    $region32: #{_forward_impl.1} parent=1 // pred_region
      %59 = dma.done [#allocation6], 32768
    $region33: #{_forward_impl.1} parent=1 // pred_fallthru
      _
    %v61 = vld [vmem:[#allocation2] sm:$0x3]
    %v62 = vpack.c.bf16 %v61, %v61
    %v63 = vld [vmem:[#allocation5] sm:$0xff]
    %v64 = vld [vmem:[#allocation5 + $0x8] sm:$0xff]
    %v65 = vld [vmem:[#allocation5 + $0x10] sm:$0xff]
    %v66 = vld [vmem:[#allocation5 + $0x18] sm:$0xff]
    %v67 = vld [vmem:[#allocation5 + $0x20] sm:$0xff]
    %v68 = vld [vmem:[#allocation5 + $0x28] sm:$0xff]
    %v69 = vld [vmem:[#allocation5 + $0x30] sm:$0xff]
    %v70 = vld [vmem:[#allocation5 + $0x38] sm:$0xff]
    %v71 = vld [vmem:[#allocation5 + $0x40] sm:$0xff]
    %v72 = vld [vmem:[#allocation5 + $0x48] sm:$0xff]
    %v73 = vld [vmem:[#allocation5 + $0x50] sm:$0xff]
    %v74 = vld [vmem:[#allocation5 + $0x58] sm:$0xff]
    %v75 = vld [vmem:[#allocation5 + $0x60] sm:$0xff]
    %v76 = vld [vmem:[#allocation5 + $0x68] sm:$0xff]
    %v77 = vld [vmem:[#allocation5 + $0x70] sm:$0xff]
    %v78 = vld [vmem:[#allocation5 + $0x78] sm:$0xff]
    %v79 = vld [vmem:[%s2] sm:$0xf]
    %v81 = vlaneseq
    %v82 = vshrl.u32 %v81, 7
    %v83 = vsub.s32 0, %v82
    %v84 = vrot.slane %v79, %v83
    %v85 = vlaneseq
    %v86 = vshrl.u32 %v85, 7
    %v87 = vsub.s32 1, %v86
    %v88 = vrot.slane %v79, %v87
    %v89 = vlaneseq
    %v90 = vshrl.u32 %v89, 7
    %v91 = vsub.s32 2, %v90
    %v92 = vrot.slane %v79, %v91
    %v93 = vlaneseq
    %v94 = vshrl.u32 %v93, 7
    %v95 = vsub.s32 3, %v94
    %v96 = vrot.slane %v79, %v95
    %v117 = vunpack.c.l.b16 %v63
    %v118 = vunpack.c.h.b16 %v63
    %v119 = vunpack.c.l.b16 %v64
    %v120 = vunpack.c.h.b16 %v64
    %v121 = vunpack.c.l.b16 %v65
    %v122 = vunpack.c.h.b16 %v65
    %v123 = vunpack.c.l.b16 %v66
    %v124 = vunpack.c.h.b16 %v66
    %v125 = vunpack.c.l.b16 %v67
    %v126 = vunpack.c.h.b16 %v67
    %v127 = vunpack.c.l.b16 %v68
    %v128 = vunpack.c.h.b16 %v68
    %v129 = vunpack.c.l.b16 %v69
    %v130 = vunpack.c.h.b16 %v69
    %v131 = vunpack.c.l.b16 %v70
    %v132 = vunpack.c.h.b16 %v70
    %v133 = vunpack.c.l.b16 %v71
    %v134 = vunpack.c.h.b16 %v71
    %v135 = vunpack.c.l.b16 %v72
    %v136 = vunpack.c.h.b16 %v72
    %v137 = vunpack.c.l.b16 %v73
    %v138 = vunpack.c.h.b16 %v73
    %v139 = vunpack.c.l.b16 %v74
    %v140 = vunpack.c.h.b16 %v74
    %v141 = vunpack.c.l.b16 %v75
    %v142 = vunpack.c.h.b16 %v75
    %v143 = vunpack.c.l.b16 %v76
    %v144 = vunpack.c.h.b16 %v76
    %v145 = vunpack.c.l.b16 %v77
    %v146 = vunpack.c.h.b16 %v77
    %v147 = vunpack.c.l.b16 %v78
    %v148 = vunpack.c.h.b16 %v78
    %v149 = vpack.c.b16 %v121, %v117
    %v150 = vpack.c.b16 %v122, %v118
    %v151 = vpack.c.b16 %v123, %v119
    %v152 = vpack.c.b16 %v124, %v120
    %v153 = vpack.c.b16 %v129, %v125
    %v154 = vpack.c.b16 %v130, %v126
    %v155 = vpack.c.b16 %v131, %v127
    %v156 = vpack.c.b16 %v132, %v128
    %v157 = vpack.c.b16 %v137, %v133
    %v158 = vpack.c.b16 %v138, %v134
    %v159 = vpack.c.b16 %v139, %v135
    %v160 = vpack.c.b16 %v140, %v136
    %v161 = vpack.c.b16 %v145, %v141
    %v162 = vpack.c.b16 %v146, %v142
    %v163 = vpack.c.b16 %v147, %v143
    %v164 = vpack.c.b16 %v148, %v144
    %vm181 = vcmask 523264
    %v183 = vsel %vm181, %v62, 0
    %185 = vmatprep.subr.bf16.mxu0 %v150
    %186 = vmatpush1.bf16.msra.mxu0 %v149
    %187 = vmatprep.subr.bf16.mxu0 %v154
    %188 = vmatpush1.bf16.msra.mxu0 %v153
    %189 = vmatprep.subr.bf16.mxu0 %v158
    %190 = vmatpush1.bf16.msra.mxu0 %v157
    %191 = vmatprep.subr.bf16.mxu0 %v162
    %192 = vmatpush1.bf16.msra.mxu0 %v161
    %193 = vmatprep.subr.bf16.mxu0 0
    %194 = vmatpush1.bf16.msra.mxu0 0
    %195 = vmatprep.subr.bf16.mxu0 0
    %196 = vmatpush1.bf16.msra.mxu0 0
    %197 = vmatprep.subr.bf16.mxu0 0
    %198 = vmatpush1.bf16.msra.mxu0 0
    %199 = vmatprep.subr.bf16.mxu0 0
    %200 = vmatpush1.bf16.msra.mxu0 0
    %201 = vmatprep.subr.bf16.mxu0 0
    %202 = vmatpush1.bf16.msra.mxu0 0
    %203 = vmatprep.subr.bf16.mxu0 0
    %204 = vmatpush1.bf16.msra.mxu0 0
    %205 = vmatprep.subr.bf16.mxu0 0
    %206 = vmatpush1.bf16.msra.mxu0 0
    %207 = vmatprep.subr.bf16.mxu0 0
    %208 = vmatpush1.bf16.msra.mxu0 0
    %209 = vmatprep.subr.bf16.mxu0 0
    %210 = vmatpush1.bf16.msra.mxu0 0
    %211 = vmatprep.subr.bf16.mxu0 0
    %212 = vmatpush1.bf16.msra.mxu0 0
    %213 = vmatprep.subr.bf16.mxu0 0
    %214 = vmatpush1.bf16.msra.mxu0 0
    %215 = vmatprep.subr.bf16.mxu0 0
    %216 = vmatpush1.bf16.msra.mxu0 0
    %217 = vmatprep.mubr.bf16.mxu0 0
    %218 = vmatmul.mubr.bf16.gmra.mrb[0].mxu0 %v183
    %v219 = vpop.f32.mrb[0].mxu0
    %v220 = vadd.f32 %v84, %v219
    %v221 = vpop.f32.mrb[0].mxu0
    %v222 = vadd.f32 %v88, %v221
    %v223 = vpop.f32.mrb[0].mxu0
    %v224 = vpop.f32.mrb[0].mxu0
    %225 = vdwg.mxu0
    %226 = vmatprep.subr.bf16.mxu0 %v152
    %227 = vmatpush1.bf16.msra.mxu0 %v151
    %228 = vmatprep.subr.bf16.mxu0 %v156
    %229 = vmatpush1.bf16.msra.mxu0 %v155
    %230 = vmatprep.subr.bf16.mxu0 %v160
    %231 = vmatpush1.bf16.msra.mxu0 %v159
    %232 = vmatprep.subr.bf16.mxu0 %v164
    %233 = vmatpush1.bf16.msra.mxu0 %v163
    %234 = vmatprep.subr.bf16.mxu0 0
    %235 = vmatpush1.bf16.msra.mxu0 0
    %236 = vmatprep.subr.bf16.mxu0 0
    %237 = vmatpush1.bf16.msra.mxu0 0
    %238 = vmatprep.subr.bf16.mxu0 0
    %239 = vmatpush1.bf16.msra.mxu0 0
    %240 = vmatprep.subr.bf16.mxu0 0
    %241 = vmatpush1.bf16.msra.mxu0 0
    %242 = vmatprep.subr.bf16.mxu0 0
    %243 = vmatpush1.bf16.msra.mxu0 0
    %244 = vmatprep.subr.bf16.mxu0 0
    %245 = vmatpush1.bf16.msra.mxu0 0
    %246 = vmatprep.subr.bf16.mxu0 0
    %247 = vmatpush1.bf16.msra.mxu0 0
    %248 = vmatprep.subr.bf16.mxu0 0
    %249 = vmatpush1.bf16.msra.mxu0 0
    %250 = vmatprep.subr.bf16.mxu0 0
    %251 = vmatpush1.bf16.msra.mxu0 0
    %252 = vmatprep.subr.bf16.mxu0 0
    %253 = vmatpush1.bf16.msra.mxu0 0
    %254 = vmatprep.subr.bf16.mxu0 0
    %255 = vmatpush1.bf16.msra.mxu0 0
    %256 = vmatprep.subr.bf16.mxu0 0
    %257 = vmatpush1.bf16.msra.mxu0 0
    %258 = vmatprep.mubr.bf16.mxu0 0
    %259 = vmatmul.mubr.bf16.gmra.mrb[0].mxu0 %v183
    %v260 = vpop.f32.mrb[0].mxu0
    %v261 = vadd.f32 %v92, %v260
    %v262 = vpop.f32.mrb[0].mxu0
    %v263 = vadd.f32 %v96, %v262
    %v264 = vpop.f32.mrb[0].mxu0
    %v265 = vpop.f32.mrb[0].mxu0
    %266 = vdwg.mxu0
    %v267 = vmax.f32 %v220, 0.0
    %v268 = vmax.f32 %v222, 0.0
    %v269 = vmax.f32 %v261, 0.0
    %v270 = vmax.f32 %v263, 0.0
    %v271 = vpack.c.bf16 %v267, %v267
    %v272 = vpack.c.bf16 %v268, %v268
    %v273 = vpack.c.bf16 %v269, %v269
    %v274 = vpack.c.bf16 %v270, %v270
    %v275 = vld [vmem:[#allocation7] sm:$0xff]
    %v276 = vld [vmem:[#allocation7 + $0x8] sm:$0xff]
    %v277 = vld [vmem:[#allocation7 + $0x10] sm:$0xff]
    %v278 = vld [vmem:[#allocation7 + $0x18] sm:$0xff]
    %v279 = vld [vmem:[#allocation7 + $0x20] sm:$0xff]
    %v280 = vld [vmem:[#allocation7 + $0x28] sm:$0xff]
    %v281 = vld [vmem:[#allocation7 + $0x30] sm:$0xff]
    %v282 = vld [vmem:[#allocation7 + $0x38] sm:$0xff]
    %v283 = vld [vmem:[#allocation7 + $0x40] sm:$0xff]
    %v284 = vld [vmem:[#allocation7 + $0x48] sm:$0xff]
    %v285 = vld [vmem:[#allocation7 + $0x50] sm:$0xff]
    %v286 = vld [vmem:[#allocation7 + $0x58] sm:$0xff]
    %v287 = vld [vmem:[#allocation7 + $0x60] sm:$0xff]
    %v288 = vld [vmem:[#allocation7 + $0x68] sm:$0xff]
    %v289 = vld [vmem:[#allocation7 + $0x70] sm:$0xff]
    %v290 = vld [vmem:[#allocation7 + $0x78] sm:$0xff]
    %v291 = vld [vmem:[#allocation7 + $0x80] sm:$0xff]
    %v292 = vld [vmem:[#allocation7 + $0x88] sm:$0xff]
    %v293 = vld [vmem:[#allocation7 + $0x90] sm:$0xff]
    %v294 = vld [vmem:[#allocation7 + $0x98] sm:$0xff]
    %v295 = vld [vmem:[#allocation7 + $0xa0] sm:$0xff]
    %v296 = vld [vmem:[#allocation7 + $0xa8] sm:$0xff]
    %v297 = vld [vmem:[#allocation7 + $0xb0] sm:$0xff]
    %v298 = vld [vmem:[#allocation7 + $0xb8] sm:$0xff]
    %v299 = vld [vmem:[#allocation7 + $0xc0] sm:$0xff]
    %v300 = vld [vmem:[#allocation7 + $0xc8] sm:$0xff]
    %v301 = vld [vmem:[#allocation7 + $0xd0] sm:$0xff]
    %v302 = vld [vmem:[#allocation7 + $0xd8] sm:$0xff]
    %v303 = vld [vmem:[#allocation7 + $0xe0] sm:$0xff]
    %v304 = vld [vmem:[#allocation7 + $0xe8] sm:$0xff]
    %v305 = vld [vmem:[#allocation7 + $0xf0] sm:$0xff]
    %v306 = vld [vmem:[#allocation7 + $0xf8] sm:$0xff]
    %v307 = vld [vmem:[#allocation7 + $0x100] sm:$0xff]
    %v308 = vld [vmem:[#allocation7 + $0x108] sm:$0xff]
    %v309 = vld [vmem:[#allocation7 + $0x110] sm:$0xff]
    %v310 = vld [vmem:[#allocation7 + $0x118] sm:$0xff]
    %v311 = vld [vmem:[#allocation7 + $0x120] sm:$0xff]
    %v312 = vld [vmem:[#allocation7 + $0x128] sm:$0xff]
    %v313 = vld [vmem:[#allocation7 + $0x130] sm:$0xff]
    %v314 = vld [vmem:[#allocation7 + $0x138] sm:$0xff]
    %v315 = vld [vmem:[#allocation7 + $0x140] sm:$0xff]
    %v316 = vld [vmem:[#allocation7 + $0x148] sm:$0xff]
    %v317 = vld [vmem:[#allocation7 + $0x150] sm:$0xff]
    %v318 = vld [vmem:[#allocation7 + $0x158] sm:$0xff]
    %v319 = vld [vmem:[#allocation7 + $0x160] sm:$0xff]
    %v320 = vld [vmem:[#allocation7 + $0x168] sm:$0xff]
    %v321 = vld [vmem:[#allocation7 + $0x170] sm:$0xff]
    %v322 = vld [vmem:[#allocation7 + $0x178] sm:$0xff]
    %v323 = vld [vmem:[#allocation7 + $0x180] sm:$0xff]
    %v324 = vld [vmem:[#allocation7 + $0x188] sm:$0xff]
    %v325 = vld [vmem:[#allocation7 + $0x190] sm:$0xff]
    %v326 = vld [vmem:[#allocation7 + $0x198] sm:$0xff]
    %v327 = vld [vmem:[#allocation7 + $0x1a0] sm:$0xff]
    %v328 = vld [vmem:[#allocation7 + $0x1a8] sm:$0xff]
    %v329 = vld [vmem:[#allocation7 + $0x1b0] sm:$0xff]
    %v330 = vld [vmem:[#allocation7 + $0x1b8] sm:$0xff]
    %v331 = vld [vmem:[#allocation7 + $0x1c0] sm:$0xff]
    %v332 = vld [vmem:[#allocation7 + $0x1c8] sm:$0xff]
    %v333 = vld [vmem:[#allocation7 + $0x1d0] sm:$0xff]
    %v334 = vld [vmem:[#allocation7 + $0x1d8] sm:$0xff]
    %v335 = vld [vmem:[#allocation7 + $0x1e0] sm:$0xff]
    %v336 = vld [vmem:[#allocation7 + $0x1e8] sm:$0xff]
    %v337 = vld [vmem:[#allocation7 + $0x1f0] sm:$0xff]
    %v338 = vld [vmem:[#allocation7 + $0x1f8] sm:$0xff]
    %v339 = vld [vmem:[#allocation7 + $0x200] sm:$0xff]
    %v340 = vld [vmem:[#allocation7 + $0x208] sm:$0xff]
    %v341 = vld [vmem:[#allocation7 + $0x210] sm:$0xff]
    %v342 = vld [vmem:[#allocation7 + $0x218] sm:$0xff]
    %v343 = vld [vmem:[#allocation7 + $0x220] sm:$0xff]
    %v344 = vld [vmem:[#allocation7 + $0x228] sm:$0xff]
    %v345 = vld [vmem:[#allocation7 + $0x230] sm:$0xff]
    %v346 = vld [vmem:[#allocation7 + $0x238] sm:$0xff]
    %v347 = vld [vmem:[#allocation7 + $0x240] sm:$0xff]
    %v348 = vld [vmem:[#allocation7 + $0x248] sm:$0xff]
    %v349 = vld [vmem:[#allocation7 + $0x250] sm:$0xff]
    %v350 = vld [vmem:[#allocation7 + $0x258] sm:$0xff]
    %v351 = vld [vmem:[#allocation7 + $0x260] sm:$0xff]
    %v352 = vld [vmem:[#allocation7 + $0x268] sm:$0xff]
    %v353 = vld [vmem:[#allocation7 + $0x270] sm:$0xff]
    %v354 = vld [vmem:[#allocation7 + $0x278] sm:$0xff]
    %v355 = vld [vmem:[#allocation7 + $0x280] sm:$0xff]
    %v356 = vld [vmem:[#allocation7 + $0x288] sm:$0xff]
    %v357 = vld [vmem:[#allocation7 + $0x290] sm:$0xff]
    %v358 = vld [vmem:[#allocation7 + $0x298] sm:$0xff]
    %v359 = vld [vmem:[#allocation7 + $0x2a0] sm:$0xff]
    %v360 = vld [vmem:[#allocation7 + $0x2a8] sm:$0xff]
    %v361 = vld [vmem:[#allocation7 + $0x2b0] sm:$0xff]
    %v362 = vld [vmem:[#allocation7 + $0x2b8] sm:$0xff]
    %v363 = vld [vmem:[#allocation7 + $0x2c0] sm:$0xff]
    %v364 = vld [vmem:[#allocation7 + $0x2c8] sm:$0xff]
    %v365 = vld [vmem:[#allocation7 + $0x2d0] sm:$0xff]
    %v366 = vld [vmem:[#allocation7 + $0x2d8] sm:$0xff]
    %v367 = vld [vmem:[#allocation7 + $0x2e0] sm:$0xff]
    %v368 = vld [vmem:[#allocation7 + $0x2e8] sm:$0xff]
    %v369 = vld [vmem:[#allocation7 + $0x2f0] sm:$0xff]
    %v370 = vld [vmem:[#allocation7 + $0x2f8] sm:$0xff]
    %v371 = vld [vmem:[#allocation7 + $0x300] sm:$0xff]
    %v372 = vld [vmem:[#allocation7 + $0x308] sm:$0xff]
    %v373 = vld [vmem:[#allocation7 + $0x310] sm:$0xff]
    %v374 = vld [vmem:[#allocation7 + $0x318] sm:$0xff]
    %v375 = vld [vmem:[#allocation7 + $0x320] sm:$0xff]
    %v376 = vld [vmem:[#allocation7 + $0x328] sm:$0xff]
    %v377 = vld [vmem:[#allocation7 + $0x330] sm:$0xff]
    %v378 = vld [vmem:[#allocation7 + $0x338] sm:$0xff]
    %v379 = vld [vmem:[#allocation7 + $0x340] sm:$0xff]
    %v380 = vld [vmem:[#allocation7 + $0x348] sm:$0xff]
    %v381 = vld [vmem:[#allocation7 + $0x350] sm:$0xff]
    %v382 = vld [vmem:[#allocation7 + $0x358] sm:$0xff]
    %v383 = vld [vmem:[#allocation7 + $0x360] sm:$0xff]
    %v384 = vld [vmem:[#allocation7 + $0x368] sm:$0xff]
    %v385 = vld [vmem:[#allocation7 + $0x370] sm:$0xff]
    %v386 = vld [vmem:[#allocation7 + $0x378] sm:$0xff]
    %v387 = vld [vmem:[#allocation7 + $0x380] sm:$0xff]
    %v388 = vld [vmem:[#allocation7 + $0x388] sm:$0xff]
    %v389 = vld [vmem:[#allocation7 + $0x390] sm:$0xff]
    %v390 = vld [vmem:[#allocation7 + $0x398] sm:$0xff]
    %v391 = vld [vmem:[#allocation7 + $0x3a0] sm:$0xff]
    %v392 = vld [vmem:[#allocation7 + $0x3a8] sm:$0xff]
    %v393 = vld [vmem:[#allocation7 + $0x3b0] sm:$0xff]
    %v394 = vld [vmem:[#allocation7 + $0x3b8] sm:$0xff]
    %v395 = vld [vmem:[#allocation7 + $0x3c0] sm:$0xff]
    %v396 = vld [vmem:[#allocation7 + $0x3c8] sm:$0xff]
    %v397 = vld [vmem:[#allocation7 + $0x3d0] sm:$0xff]
    %v398 = vld [vmem:[#allocation7 + $0x3d8] sm:$0xff]
    %v399 = vld [vmem:[#allocation7 + $0x3e0] sm:$0xff]
    %v400 = vld [vmem:[#allocation7 + $0x3e8] sm:$0xff]
    %v401 = vld [vmem:[#allocation7 + $0x3f0] sm:$0xff]
    %v402 = vld [vmem:[#allocation7 + $0x3f8] sm:$0xff]
    %v403 = vld [vmem:[#allocation7 + $0x400] sm:$0xff]
    %v404 = vld [vmem:[#allocation7 + $0x408] sm:$0xff]
    %v405 = vld [vmem:[#allocation7 + $0x410] sm:$0xff]
    %v406 = vld [vmem:[#allocation7 + $0x418] sm:$0xff]
    %v407 = vld [vmem:[#allocation7 + $0x420] sm:$0xff]
    %v408 = vld [vmem:[#allocation7 + $0x428] sm:$0xff]
    %v409 = vld [vmem:[#allocation7 + $0x430] sm:$0xff]
    %v410 = vld [vmem:[#allocation7 + $0x438] sm:$0xff]
    %v411 = vld [vmem:[#allocation7 + $0x440] sm:$0xff]
    %v412 = vld [vmem:[#allocation7 + $0x448] sm:$0xff]
    %v413 = vld [vmem:[#allocation7 + $0x450] sm:$0xff]
    %v414 = vld [vmem:[#allocation7 + $0x458] sm:$0xff]
    %v415 = vld [vmem:[#allocation7 + $0x460] sm:$0xff]
    %v416 = vld [vmem:[#allocation7 + $0x468] sm:$0xff]
    %v417 = vld [vmem:[#allocation7 + $0x470] sm:$0xff]
    %v418 = vld [vmem:[#allocation7 + $0x478] sm:$0xff]
    %v419 = vld [vmem:[#allocation7 + $0x480] sm:$0xff]
    %v420 = vld [vmem:[#allocation7 + $0x488] sm:$0xff]
    %v421 = vld [vmem:[#allocation7 + $0x490] sm:$0xff]
    %v422 = vld [vmem:[#allocation7 + $0x498] sm:$0xff]
    %v423 = vld [vmem:[#allocation7 + $0x4a0] sm:$0xff]
    %v424 = vld [vmem:[#allocation7 + $0x4a8] sm:$0xff]
    %v425 = vld [vmem:[#allocation7 + $0x4b0] sm:$0xff]
    %v426 = vld [vmem:[#allocation7 + $0x4b8] sm:$0xff]
    %v427 = vld [vmem:[#allocation7 + $0x4c0] sm:$0xff]
    %v428 = vld [vmem:[#allocation7 + $0x4c8] sm:$0xff]
    %v429 = vld [vmem:[#allocation7 + $0x4d0] sm:$0xff]
    %v430 = vld [vmem:[#allocation7 + $0x4d8] sm:$0xff]
    %v431 = vld [vmem:[#allocation7 + $0x4e0] sm:$0xff]
    %v432 = vld [vmem:[#allocation7 + $0x4e8] sm:$0xff]
    %v433 = vld [vmem:[#allocation7 + $0x4f0] sm:$0xff]
    %v434 = vld [vmem:[#allocation7 + $0x4f8] sm:$0xff]
    %v435 = vld [vmem:[#allocation7 + $0x500] sm:$0xff]
    %v436 = vld [vmem:[#allocation7 + $0x508] sm:$0xff]
    %v437 = vld [vmem:[#allocation7 + $0x510] sm:$0xff]
    %v438 = vld [vmem:[#allocation7 + $0x518] sm:$0xff]
    %v439 = vld [vmem:[#allocation7 + $0x520] sm:$0xff]
    %v440 = vld [vmem:[#allocation7 + $0x528] sm:$0xff]
    %v441 = vld [vmem:[#allocation7 + $0x530] sm:$0xff]
    %v442 = vld [vmem:[#allocation7 + $0x538] sm:$0xff]
    %v443 = vld [vmem:[#allocation7 + $0x540] sm:$0xff]
    %v444 = vld [vmem:[#allocation7 + $0x548] sm:$0xff]
    %v445 = vld [vmem:[#allocation7 + $0x550] sm:$0xff]
    %v446 = vld [vmem:[#allocation7 + $0x558] sm:$0xff]
    %v447 = vld [vmem:[#allocation7 + $0x560] sm:$0xff]
    %v448 = vld [vmem:[#allocation7 + $0x568] sm:$0xff]
    %v449 = vld [vmem:[#allocation7 + $0x570] sm:$0xff]
    %v450 = vld [vmem:[#allocation7 + $0x578] sm:$0xff]
    %v451 = vld [vmem:[#allocation7 + $0x580] sm:$0xff]
    %v452 = vld [vmem:[#allocation7 + $0x588] sm:$0xff]
    %v453 = vld [vmem:[#allocation7 + $0x590] sm:$0xff]
    %v454 = vld [vmem:[#allocation7 + $0x598] sm:$0xff]
    %v455 = vld [vmem:[#allocation7 + $0x5a0] sm:$0xff]
    %v456 = vld [vmem:[#allocation7 + $0x5a8] sm:$0xff]
    %v457 = vld [vmem:[#allocation7 + $0x5b0] sm:$0xff]
    %v458 = vld [vmem:[#allocation7 + $0x5b8] sm:$0xff]
    %v459 = vld [vmem:[#allocation7 + $0x5c0] sm:$0xff]
    %v460 = vld [vmem:[#allocation7 + $0x5c8] sm:$0xff]
    %v461 = vld [vmem:[#allocation7 + $0x5d0] sm:$0xff]
    %v462 = vld [vmem:[#allocation7 + $0x5d8] sm:$0xff]
    %v463 = vld [vmem:[#allocation7 + $0x5e0] sm:$0xff]
    %v464 = vld [vmem:[#allocation7 + $0x5e8] sm:$0xff]
    %v465 = vld [vmem:[#allocation7 + $0x5f0] sm:$0xff]
    %v466 = vld [vmem:[#allocation7 + $0x5f8] sm:$0xff]
    %v467 = vld [vmem:[#allocation7 + $0x600] sm:$0xff]
    %v468 = vld [vmem:[#allocation7 + $0x608] sm:$0xff]
    %v469 = vld [vmem:[#allocation7 + $0x610] sm:$0xff]
    %v470 = vld [vmem:[#allocation7 + $0x618] sm:$0xff]
    %v471 = vld [vmem:[#allocation7 + $0x620] sm:$0xff]
    %v472 = vld [vmem:[#allocation7 + $0x628] sm:$0xff]
    %v473 = vld [vmem:[#allocation7 + $0x630] sm:$0xff]
    %v474 = vld [vmem:[#allocation7 + $0x638] sm:$0xff]
    %v475 = vld [vmem:[#allocation7 + $0x640] sm:$0xff]
    %v476 = vld [vmem:[#allocation7 + $0x648] sm:$0xff]
    %v477 = vld [vmem:[#allocation7 + $0x650] sm:$0xff]
    %v478 = vld [vmem:[#allocation7 + $0x658] sm:$0xff]
    %v479 = vld [vmem:[#allocation7 + $0x660] sm:$0xff]
    %v480 = vld [vmem:[#allocation7 + $0x668] sm:$0xff]
    %v481 = vld [vmem:[#allocation7 + $0x670] sm:$0xff]
    %v482 = vld [vmem:[#allocation7 + $0x678] sm:$0xff]
    %v483 = vld [vmem:[#allocation7 + $0x680] sm:$0xff]
    %v484 = vld [vmem:[#allocation7 + $0x688] sm:$0xff]
    %v485 = vld [vmem:[#allocation7 + $0x690] sm:$0xff]
    %v486 = vld [vmem:[#allocation7 + $0x698] sm:$0xff]
    %v487 = vld [vmem:[#allocation7 + $0x6a0] sm:$0xff]
    %v488 = vld [vmem:[#allocation7 + $0x6a8] sm:$0xff]
    %v489 = vld [vmem:[#allocation7 + $0x6b0] sm:$0xff]
    %v490 = vld [vmem:[#allocation7 + $0x6b8] sm:$0xff]
    %v491 = vld [vmem:[#allocation7 + $0x6c0] sm:$0xff]
    %v492 = vld [vmem:[#allocation7 + $0x6c8] sm:$0xff]
    %v493 = vld [vmem:[#allocation7 + $0x6d0] sm:$0xff]
    %v494 = vld [vmem:[#allocation7 + $0x6d8] sm:$0xff]
    %v495 = vld [vmem:[#allocation7 + $0x6e0] sm:$0xff]
    %v496 = vld [vmem:[#allocation7 + $0x6e8] sm:$0xff]
    %v497 = vld [vmem:[#allocation7 + $0x6f0] sm:$0xff]
    %v498 = vld [vmem:[#allocation7 + $0x6f8] sm:$0xff]
    %v499 = vld [vmem:[#allocation7 + $0x700] sm:$0xff]
    %v500 = vld [vmem:[#allocation7 + $0x708] sm:$0xff]
    %v501 = vld [vmem:[#allocation7 + $0x710] sm:$0xff]
    %v502 = vld [vmem:[#allocation7 + $0x718] sm:$0xff]
    %v503 = vld [vmem:[#allocation7 + $0x720] sm:$0xff]
    %v504 = vld [vmem:[#allocation7 + $0x728] sm:$0xff]
    %v505 = vld [vmem:[#allocation7 + $0x730] sm:$0xff]
    %v506 = vld [vmem:[#allocation7 + $0x738] sm:$0xff]
    %v507 = vld [vmem:[#allocation7 + $0x740] sm:$0xff]
    %v508 = vld [vmem:[#allocation7 + $0x748] sm:$0xff]
    %v509 = vld [vmem:[#allocation7 + $0x750] sm:$0xff]
    %v510 = vld [vmem:[#allocation7 + $0x758] sm:$0xff]
    %v511 = vld [vmem:[#allocation7 + $0x760] sm:$0xff]
    %v512 = vld [vmem:[#allocation7 + $0x768] sm:$0xff]
    %v513 = vld [vmem:[#allocation7 + $0x770] sm:$0xff]
    %v514 = vld [vmem:[#allocation7 + $0x778] sm:$0xff]
    %v515 = vld [vmem:[#allocation7 + $0x780] sm:$0xff]
    %v516 = vld [vmem:[#allocation7 + $0x788] sm:$0xff]
    %v517 = vld [vmem:[#allocation7 + $0x790] sm:$0xff]
    %v518 = vld [vmem:[#allocation7 + $0x798] sm:$0xff]
    %v519 = vld [vmem:[#allocation7 + $0x7a0] sm:$0xff]
    %v520 = vld [vmem:[#allocation7 + $0x7a8] sm:$0xff]
    %v521 = vld [vmem:[#allocation7 + $0x7b0] sm:$0xff]
    %v522 = vld [vmem:[#allocation7 + $0x7b8] sm:$0xff]
    %v523 = vld [vmem:[#allocation7 + $0x7c0] sm:$0xff]
    %v524 = vld [vmem:[#allocation7 + $0x7c8] sm:$0xff]
    %v525 = vld [vmem:[#allocation7 + $0x7d0] sm:$0xff]
    %v526 = vld [vmem:[#allocation7 + $0x7d8] sm:$0xff]
    %v527 = vld [vmem:[#allocation7 + $0x7e0] sm:$0xff]
    %v528 = vld [vmem:[#allocation7 + $0x7e8] sm:$0xff]
    %v529 = vld [vmem:[#allocation7 + $0x7f0] sm:$0xff]
    %v530 = vld [vmem:[#allocation7 + $0x7f8] sm:$0xff]
    %v531 = vld [vmem:[%s4] sm:$0xff]
    %v533 = vlaneseq
    %v534 = vshrl.u32 %v533, 7
    %v535 = vsub.s32 0, %v534
    %v536 = vrot.slane %v531, %v535
    %v537 = vlaneseq
    %v538 = vshrl.u32 %v537, 7
    %v539 = vsub.s32 1, %v538
    %v540 = vrot.slane %v531, %v539
    %v541 = vlaneseq
    %v542 = vshrl.u32 %v541, 7
    %v543 = vsub.s32 2, %v542
    %v544 = vrot.slane %v531, %v543
    %v545 = vlaneseq
    %v546 = vshrl.u32 %v545, 7
    %v547 = vsub.s32 3, %v546
    %v548 = vrot.slane %v531, %v547
    %v549 = vlaneseq
    %v550 = vshrl.u32 %v549, 7
    %v551 = vsub.s32 4, %v550
    %v552 = vrot.slane %v531, %v551
    %v553 = vlaneseq
    %v554 = vshrl.u32 %v553, 7
    %v555 = vsub.s32 5, %v554
    %v556 = vrot.slane %v531, %v555
    %v557 = vlaneseq
    %v558 = vshrl.u32 %v557, 7
    %v559 = vsub.s32 6, %v558
    %v560 = vrot.slane %v531, %v559
    %v561 = vlaneseq
    %v562 = vshrl.u32 %v561, 7
    %v563 = vsub.s32 7, %v562
    %v564 = vrot.slane %v531, %v563
    %v829 = vunpack.c.l.b16 %v275
    %v830 = vunpack.c.h.b16 %v275
    %v831 = vunpack.c.l.b16 %v276
    %v832 = vunpack.c.h.b16 %v276
    %v833 = vunpack.c.l.b16 %v277
    %v834 = vunpack.c.h.b16 %v277
    %v835 = vunpack.c.l.b16 %v278
    %v836 = vunpack.c.h.b16 %v278
    %v837 = vunpack.c.l.b16 %v279
    %v838 = vunpack.c.h.b16 %v279
    %v839 = vunpack.c.l.b16 %v280
    %v840 = vunpack.c.h.b16 %v280
    %v841 = vunpack.c.l.b16 %v281
    %v842 = vunpack.c.h.b16 %v281
    %v843 = vunpack.c.l.b16 %v282
    %v844 = vunpack.c.h.b16 %v282
    %v845 = vunpack.c.l.b16 %v283
    %v846 = vunpack.c.h.b16 %v283
    %v847 = vunpack.c.l.b16 %v284
    %v848 = vunpack.c.h.b16 %v284
    %v849 = vunpack.c.l.b16 %v285
    %v850 = vunpack.c.h.b16 %v285
    %v851 = vunpack.c.l.b16 %v286
    %v852 = vunpack.c.h.b16 %v286
    %v853 = vunpack.c.l.b16 %v287
    %v854 = vunpack.c.h.b16 %v287
    %v855 = vunpack.c.l.b16 %v288
    %v856 = vunpack.c.h.b16 %v288
    %v857 = vunpack.c.l.b16 %v289
    %v858 = vunpack.c.h.b16 %v289
    %v859 = vunpack.c.l.b16 %v290
    %v860 = vunpack.c.h.b16 %v290
    %v861 = vunpack.c.l.b16 %v291
    %v862 = vunpack.c.h.b16 %v291
    %v863 = vunpack.c.l.b16 %v292
    %v864 = vunpack.c.h.b16 %v292
    %v865 = vunpack.c.l.b16 %v293
    %v866 = vunpack.c.h.b16 %v293
    %v867 = vunpack.c.l.b16 %v294
    %v868 = vunpack.c.h.b16 %v294
    %v869 = vunpack.c.l.b16 %v295
    %v870 = vunpack.c.h.b16 %v295
    %v871 = vunpack.c.l.b16 %v296
    %v872 = vunpack.c.h.b16 %v296
    %v873 = vunpack.c.l.b16 %v297
    %v874 = vunpack.c.h.b16 %v297
    %v875 = vunpack.c.l.b16 %v298
    %v876 = vunpack.c.h.b16 %v298
    %v877 = vunpack.c.l.b16 %v299
    %v878 = vunpack.c.h.b16 %v299
    %v879 = vunpack.c.l.b16 %v300
    %v880 = vunpack.c.h.b16 %v300
    %v881 = vunpack.c.l.b16 %v301
    %v882 = vunpack.c.h.b16 %v301
    %v883 = vunpack.c.l.b16 %v302
    %v884 = vunpack.c.h.b16 %v302
    %v885 = vunpack.c.l.b16 %v303
    %v886 = vunpack.c.h.b16 %v303
    %v887 = vunpack.c.l.b16 %v304
    %v888 = vunpack.c.h.b16 %v304
    %v889 = vunpack.c.l.b16 %v305
    %v890 = vunpack.c.h.b16 %v305
    %v891 = vunpack.c.l.b16 %v306
    %v892 = vunpack.c.h.b16 %v306
    %v893 = vunpack.c.l.b16 %v307
    %v894 = vunpack.c.h.b16 %v307
    %v895 = vunpack.c.l.b16 %v308
    %v896 = vunpack.c.h.b16 %v308
    %v897 = vunpack.c.l.b16 %v309
    %v898 = vunpack.c.h.b16 %v309
    %v899 = vunpack.c.l.b16 %v310
    %v900 = vunpack.c.h.b16 %v310
    %v901 = vunpack.c.l.b16 %v311
    %v902 = vunpack.c.h.b16 %v311
    %v903 = vunpack.c.l.b16 %v312
    %v904 = vunpack.c.h.b16 %v312
    %v905 = vunpack.c.l.b16 %v313
    %v906 = vunpack.c.h.b16 %v313
    %v907 = vunpack.c.l.b16 %v314
    %v908 = vunpack.c.h.b16 %v314
    %v909 = vunpack.c.l.b16 %v315
    %v910 = vunpack.c.h.b16 %v315
    %v911 = vunpack.c.l.b16 %v316
    %v912 = vunpack.c.h.b16 %v316
    %v913 = vunpack.c.l.b16 %v317
    %v914 = vunpack.c.h.b16 %v317
    %v915 = vunpack.c.l.b16 %v318
    %v916 = vunpack.c.h.b16 %v318
    %v917 = vunpack.c.l.b16 %v319
    %v918 = vunpack.c.h.b16 %v319
    %v919 = vunpack.c.l.b16 %v320
    %v920 = vunpack.c.h.b16 %v320
    %v921 = vunpack.c.l.b16 %v321
    %v922 = vunpack.c.h.b16 %v321
    %v923 = vunpack.c.l.b16 %v322
    %v924 = vunpack.c.h.b16 %v322
    %v925 = vunpack.c.l.b16 %v323
    %v926 = vunpack.c.h.b16 %v323
    %v927 = vunpack.c.l.b16 %v324
    %v928 = vunpack.c.h.b16 %v324
    %v929 = vunpack.c.l.b16 %v325
    %v930 = vunpack.c.h.b16 %v325
    %v931 = vunpack.c.l.b16 %v326
    %v932 = vunpack.c.h.b16 %v326
    %v933 = vunpack.c.l.b16 %v327
    %v934 = vunpack.c.h.b16 %v327
    %v935 = vunpack.c.l.b16 %v328
    %v936 = vunpack.c.h.b16 %v328
    %v937 = vunpack.c.l.b16 %v329
    %v938 = vunpack.c.h.b16 %v329
    %v939 = vunpack.c.l.b16 %v330
    %v940 = vunpack.c.h.b16 %v330
    %v941 = vunpack.c.l.b16 %v331
    %v942 = vunpack.c.h.b16 %v331
    %v943 = vunpack.c.l.b16 %v332
    %v944 = vunpack.c.h.b16 %v332
    %v945 = vunpack.c.l.b16 %v333
    %v946 = vunpack.c.h.b16 %v333
    %v947 = vunpack.c.l.b16 %v334
    %v948 = vunpack.c.h.b16 %v334
    %v949 = vunpack.c.l.b16 %v335
    %v950 = vunpack.c.h.b16 %v335
    %v951 = vunpack.c.l.b16 %v336
    %v952 = vunpack.c.h.b16 %v336
    %v953 = vunpack.c.l.b16 %v337
    %v954 = vunpack.c.h.b16 %v337
    %v955 = vunpack.c.l.b16 %v338
    %v956 = vunpack.c.h.b16 %v338
    %v957 = vunpack.c.l.b16 %v339
    %v958 = vunpack.c.h.b16 %v339
    %v959 = vunpack.c.l.b16 %v340
    %v960 = vunpack.c.h.b16 %v340
    %v961 = vunpack.c.l.b16 %v341
    %v962 = vunpack.c.h.b16 %v341
    %v963 = vunpack.c.l.b16 %v342
    %v964 = vunpack.c.h.b16 %v342
    %v965 = vunpack.c.l.b16 %v343
    %v966 = vunpack.c.h.b16 %v343
    %v967 = vunpack.c.l.b16 %v344
    %v968 = vunpack.c.h.b16 %v344
    %v969 = vunpack.c.l.b16 %v345
    %v970 = vunpack.c.h.b16 %v345
    %v971 = vunpack.c.l.b16 %v346
    %v972 = vunpack.c.h.b16 %v346
    %v973 = vunpack.c.l.b16 %v347
    %v974 = vunpack.c.h.b16 %v347
    %v975 = vunpack.c.l.b16 %v348
    %v976 = vunpack.c.h.b16 %v348
    %v977 = vunpack.c.l.b16 %v349
    %v978 = vunpack.c.h.b16 %v349
    %v979 = vunpack.c.l.b16 %v350
    %v980 = vunpack.c.h.b16 %v350
    %v981 = vunpack.c.l.b16 %v351
    %v982 = vunpack.c.h.b16 %v351
    %v983 = vunpack.c.l.b16 %v352
    %v984 = vunpack.c.h.b16 %v352
    %v985 = vunpack.c.l.b16 %v353
    %v986 = vunpack.c.h.b16 %v353
    %v987 = vunpack.c.l.b16 %v354
    %v988 = vunpack.c.h.b16 %v354
    %v989 = vunpack.c.l.b16 %v355
    %v990 = vunpack.c.h.b16 %v355
    %v991 = vunpack.c.l.b16 %v356
    %v992 = vunpack.c.h.b16 %v356
    %v993 = vunpack.c.l.b16 %v357
    %v994 = vunpack.c.h.b16 %v357
    %v995 = vunpack.c.l.b16 %v358
    %v996 = vunpack.c.h.b16 %v358
    %v997 = vunpack.c.l.b16 %v359
    %v998 = vunpack.c.h.b16 %v359
    %v999 = vunpack.c.l.b16 %v360
    %v1000 = vunpack.c.h.b16 %v360
    %v1001 = vunpack.c.l.b16 %v361
    %v1002 = vunpack.c.h.b16 %v361
    %v1003 = vunpack.c.l.b16 %v362
    %v1004 = vunpack.c.h.b16 %v362
    %v1005 = vunpack.c.l.b16 %v363
    %v1006 = vunpack.c.h.b16 %v363
    %v1007 = vunpack.c.l.b16 %v364
    %v1008 = vunpack.c.h.b16 %v364
    %v1009 = vunpack.c.l.b16 %v365
    %v1010 = vunpack.c.h.b16 %v365
    %v1011 = vunpack.c.l.b16 %v366
    %v1012 = vunpack.c.h.b16 %v366
    %v1013 = vunpack.c.l.b16 %v367
    %v1014 = vunpack.c.h.b16 %v367
    %v1015 = vunpack.c.l.b16 %v368
    %v1016 = vunpack.c.h.b16 %v368
    %v1017 = vunpack.c.l.b16 %v369
    %v1018 = vunpack.c.h.b16 %v369
    %v1019 = vunpack.c.l.b16 %v370
    %v1020 = vunpack.c.h.b16 %v370
    %v1021 = vunpack.c.l.b16 %v371
    %v1022 = vunpack.c.h.b16 %v371
    %v1023 = vunpack.c.l.b16 %v372
    %v1024 = vunpack.c.h.b16 %v372
    %v1025 = vunpack.c.l.b16 %v373
    %v1026 = vunpack.c.h.b16 %v373
    %v1027 = vunpack.c.l.b16 %v374
    %v1028 = vunpack.c.h.b16 %v374
    %v1029 = vunpack.c.l.b16 %v375
    %v1030 = vunpack.c.h.b16 %v375
    %v1031 = vunpack.c.l.b16 %v376
    %v1032 = vunpack.c.h.b16 %v376
    %v1033 = vunpack.c.l.b16 %v377
    %v1034 = vunpack.c.h.b16 %v377
    %v1035 = vunpack.c.l.b16 %v378
    %v1036 = vunpack.c.h.b16 %v378
    %v1037 = vunpack.c.l.b16 %v379
    %v1038 = vunpack.c.h.b16 %v379
    %v1039 = vunpack.c.l.b16 %v380
    %v1040 = vunpack.c.h.b16 %v380
    %v1041 = vunpack.c.l.b16 %v381
    %v1042 = vunpack.c.h.b16 %v381
    %v1043 = vunpack.c.l.b16 %v382
    %v1044 = vunpack.c.h.b16 %v382
    %v1045 = vunpack.c.l.b16 %v383
    %v1046 = vunpack.c.h.b16 %v383
    %v1047 = vunpack.c.l.b16 %v384
    %v1048 = vunpack.c.h.b16 %v384
    %v1049 = vunpack.c.l.b16 %v385
    %v1050 = vunpack.c.h.b16 %v385
    %v1051 = vunpack.c.l.b16 %v386
    %v1052 = vunpack.c.h.b16 %v386
    %v1053 = vunpack.c.l.b16 %v387
    %v1054 = vunpack.c.h.b16 %v387
    %v1055 = vunpack.c.l.b16 %v388
    %v1056 = vunpack.c.h.b16 %v388
    %v1057 = vunpack.c.l.b16 %v389
    %v1058 = vunpack.c.h.b16 %v389
    %v1059 = vunpack.c.l.b16 %v390
    %v1060 = vunpack.c.h.b16 %v390
    %v1061 = vunpack.c.l.b16 %v391
    %v1062 = vunpack.c.h.b16 %v391
    %v1063 = vunpack.c.l.b16 %v392
    %v1064 = vunpack.c.h.b16 %v392
    %v1065 = vunpack.c.l.b16 %v393
    %v1066 = vunpack.c.h.b16 %v393
    %v1067 = vunpack.c.l.b16 %v394
    %v1068 = vunpack.c.h.b16 %v394
    %v1069 = vunpack.c.l.b16 %v395
    %v1070 = vunpack.c.h.b16 %v395
    %v1071 = vunpack.c.l.b16 %v396
    %v1072 = vunpack.c.h.b16 %v396
    %v1073 = vunpack.c.l.b16 %v397
    %v1074 = vunpack.c.h.b16 %v397
    %v1075 = vunpack.c.l.b16 %v398
    %v1076 = vunpack.c.h.b16 %v398
    %v1077 = vunpack.c.l.b16 %v399
    %v1078 = vunpack.c.h.b16 %v399
    %v1079 = vunpack.c.l.b16 %v400
    %v1080 = vunpack.c.h.b16 %v400
    %v1081 = vunpack.c.l.b16 %v401
    %v1082 = vunpack.c.h.b16 %v401
    %v1083 = vunpack.c.l.b16 %v402
    %v1084 = vunpack.c.h.b16 %v402
    %v1085 = vunpack.c.l.b16 %v403
    %v1086 = vunpack.c.h.b16 %v403
    %v1087 = vunpack.c.l.b16 %v404
    %v1088 = vunpack.c.h.b16 %v404
    %v1089 = vunpack.c.l.b16 %v405
    %v1090 = vunpack.c.h.b16 %v405
    %v1091 = vunpack.c.l.b16 %v406
    %v1092 = vunpack.c.h.b16 %v406
    %v1093 = vunpack.c.l.b16 %v407
    %v1094 = vunpack.c.h.b16 %v407
    %v1095 = vunpack.c.l.b16 %v408
    %v1096 = vunpack.c.h.b16 %v408
    %v1097 = vunpack.c.l.b16 %v409
    %v1098 = vunpack.c.h.b16 %v409
    %v1099 = vunpack.c.l.b16 %v410
    %v1100 = vunpack.c.h.b16 %v410
    %v1101 = vunpack.c.l.b16 %v411
    %v1102 = vunpack.c.h.b16 %v411
    %v1103 = vunpack.c.l.b16 %v412
    %v1104 = vunpack.c.h.b16 %v412
    %v1105 = vunpack.c.l.b16 %v413
    %v1106 = vunpack.c.h.b16 %v413
    %v1107 = vunpack.c.l.b16 %v414
    %v1108 = vunpack.c.h.b16 %v414
    %v1109 = vunpack.c.l.b16 %v415
    %v1110 = vunpack.c.h.b16 %v415
    %v1111 = vunpack.c.l.b16 %v416
    %v1112 = vunpack.c.h.b16 %v416
    %v1113 = vunpack.c.l.b16 %v417
    %v1114 = vunpack.c.h.b16 %v417
    %v1115 = vunpack.c.l.b16 %v418
    %v1116 = vunpack.c.h.b16 %v418
    %v1117 = vunpack.c.l.b16 %v419
    %v1118 = vunpack.c.h.b16 %v419
    %v1119 = vunpack.c.l.b16 %v420
    %v1120 = vunpack.c.h.b16 %v420
    %v1121 = vunpack.c.l.b16 %v421
    %v1122 = vunpack.c.h.b16 %v421
    %v1123 = vunpack.c.l.b16 %v422
    %v1124 = vunpack.c.h.b16 %v422
    %v1125 = vunpack.c.l.b16 %v423
    %v1126 = vunpack.c.h.b16 %v423
    %v1127 = vunpack.c.l.b16 %v424
    %v1128 = vunpack.c.h.b16 %v424
    %v1129 = vunpack.c.l.b16 %v425
    %v1130 = vunpack.c.h.b16 %v425
    %v1131 = vunpack.c.l.b16 %v426
    %v1132 = vunpack.c.h.b16 %v426
    %v1133 = vunpack.c.l.b16 %v427
    %v1134 = vunpack.c.h.b16 %v427
    %v1135 = vunpack.c.l.b16 %v428
    %v1136 = vunpack.c.h.b16 %v428
    %v1137 = vunpack.c.l.b16 %v429
    %v1138 = vunpack.c.h.b16 %v429
    %v1139 = vunpack.c.l.b16 %v430
    %v1140 = vunpack.c.h.b16 %v430
    %v1141 = vunpack.c.l.b16 %v431
    %v1142 = vunpack.c.h.b16 %v431
    %v1143 = vunpack.c.l.b16 %v432
    %v1144 = vunpack.c.h.b16 %v432
    %v1145 = vunpack.c.l.b16 %v433
    %v1146 = vunpack.c.h.b16 %v433
    %v1147 = vunpack.c.l.b16 %v434
    %v1148 = vunpack.c.h.b16 %v434
    %v1149 = vunpack.c.l.b16 %v435
    %v1150 = vunpack.c.h.b16 %v435
    %v1151 = vunpack.c.l.b16 %v436
    %v1152 = vunpack.c.h.b16 %v436
    %v1153 = vunpack.c.l.b16 %v437
    %v1154 = vunpack.c.h.b16 %v437
    %v1155 = vunpack.c.l.b16 %v438
    %v1156 = vunpack.c.h.b16 %v438
    %v1157 = vunpack.c.l.b16 %v439
    %v1158 = vunpack.c.h.b16 %v439
    %v1159 = vunpack.c.l.b16 %v440
    %v1160 = vunpack.c.h.b16 %v440
    %v1161 = vunpack.c.l.b16 %v441
    %v1162 = vunpack.c.h.b16 %v441
    %v1163 = vunpack.c.l.b16 %v442
    %v1164 = vunpack.c.h.b16 %v442
    %v1165 = vunpack.c.l.b16 %v443
    %v1166 = vunpack.c.h.b16 %v443
    %v1167 = vunpack.c.l.b16 %v444
    %v1168 = vunpack.c.h.b16 %v444
    %v1169 = vunpack.c.l.b16 %v445
    %v1170 = vunpack.c.h.b16 %v445
    %v1171 = vunpack.c.l.b16 %v446
    %v1172 = vunpack.c.h.b16 %v446
    %v1173 = vunpack.c.l.b16 %v447
    %v1174 = vunpack.c.h.b16 %v447
    %v1175 = vunpack.c.l.b16 %v448
    %v1176 = vunpack.c.h.b16 %v448
    %v1177 = vunpack.c.l.b16 %v449
    %v1178 = vunpack.c.h.b16 %v449
    %v1179 = vunpack.c.l.b16 %v450
    %v1180 = vunpack.c.h.b16 %v450
    %v1181 = vunpack.c.l.b16 %v451
    %v1182 = vunpack.c.h.b16 %v451
    %v1183 = vunpack.c.l.b16 %v452
    %v1184 = vunpack.c.h.b16 %v452
    %v1185 = vunpack.c.l.b16 %v453
    %v1186 = vunpack.c.h.b16 %v453
    %v1187 = vunpack.c.l.b16 %v454
    %v1188 = vunpack.c.h.b16 %v454
    %v1189 = vunpack.c.l.b16 %v455
    %v1190 = vunpack.c.h.b16 %v455
    %v1191 = vunpack.c.l.b16 %v456
    %v1192 = vunpack.c.h.b16 %v456
    %v1193 = vunpack.c.l.b16 %v457
    %v1194 = vunpack.c.h.b16 %v457
    %v1195 = vunpack.c.l.b16 %v458
    %v1196 = vunpack.c.h.b16 %v458
    %v1197 = vunpack.c.l.b16 %v459
    %v1198 = vunpack.c.h.b16 %v459
    %v1199 = vunpack.c.l.b16 %v460
    %v1200 = vunpack.c.h.b16 %v460
    %v1201 = vunpack.c.l.b16 %v461
    %v1202 = vunpack.c.h.b16 %v461
    %v1203 = vunpack.c.l.b16 %v462
    %v1204 = vunpack.c.h.b16 %v462
    %v1205 = vunpack.c.l.b16 %v463
    %v1206 = vunpack.c.h.b16 %v463
    %v1207 = vunpack.c.l.b16 %v464
    %v1208 = vunpack.c.h.b16 %v464
    %v1209 = vunpack.c.l.b16 %v465
    %v1210 = vunpack.c.h.b16 %v465
    %v1211 = vunpack.c.l.b16 %v466
    %v1212 = vunpack.c.h.b16 %v466
    %v1213 = vunpack.c.l.b16 %v467
    %v1214 = vunpack.c.h.b16 %v467
    %v1215 = vunpack.c.l.b16 %v468
    %v1216 = vunpack.c.h.b16 %v468
    %v1217 = vunpack.c.l.b16 %v469
    %v1218 = vunpack.c.h.b16 %v469
    %v1219 = vunpack.c.l.b16 %v470
    %v1220 = vunpack.c.h.b16 %v470
    %v1221 = vunpack.c.l.b16 %v471
    %v1222 = vunpack.c.h.b16 %v471
    %v1223 = vunpack.c.l.b16 %v472
    %v1224 = vunpack.c.h.b16 %v472
    %v1225 = vunpack.c.l.b16 %v473
    %v1226 = vunpack.c.h.b16 %v473
    %v1227 = vunpack.c.l.b16 %v474
    %v1228 = vunpack.c.h.b16 %v474
    %v1229 = vunpack.c.l.b16 %v475
    %v1230 = vunpack.c.h.b16 %v475
    %v1231 = vunpack.c.l.b16 %v476
    %v1232 = vunpack.c.h.b16 %v476
    %v1233 = vunpack.c.l.b16 %v477
    %v1234 = vunpack.c.h.b16 %v477
    %v1235 = vunpack.c.l.b16 %v478
    %v1236 = vunpack.c.h.b16 %v478
    %v1237 = vunpack.c.l.b16 %v479
    %v1238 = vunpack.c.h.b16 %v479
    %v1239 = vunpack.c.l.b16 %v480
    %v1240 = vunpack.c.h.b16 %v480
    %v1241 = vunpack.c.l.b16 %v481
    %v1242 = vunpack.c.h.b16 %v481
    %v1243 = vunpack.c.l.b16 %v482
    %v1244 = vunpack.c.h.b16 %v482
    %v1245 = vunpack.c.l.b16 %v483
    %v1246 = vunpack.c.h.b16 %v483
    %v1247 = vunpack.c.l.b16 %v484
    %v1248 = vunpack.c.h.b16 %v484
    %v1249 = vunpack.c.l.b16 %v485
    %v1250 = vunpack.c.h.b16 %v485
    %v1251 = vunpack.c.l.b16 %v486
    %v1252 = vunpack.c.h.b16 %v486
    %v1253 = vunpack.c.l.b16 %v487
    %v1254 = vunpack.c.h.b16 %v487
    %v1255 = vunpack.c.l.b16 %v488
    %v1256 = vunpack.c.h.b16 %v488
    %v1257 = vunpack.c.l.b16 %v489
    %v1258 = vunpack.c.h.b16 %v489
    %v1259 = vunpack.c.l.b16 %v490
    %v1260 = vunpack.c.h.b16 %v490
    %v1261 = vunpack.c.l.b16 %v491
    %v1262 = vunpack.c.h.b16 %v491
    %v1263 = vunpack.c.l.b16 %v492
    %v1264 = vunpack.c.h.b16 %v492
    %v1265 = vunpack.c.l.b16 %v493
    %v1266 = vunpack.c.h.b16 %v493
    %v1267 = vunpack.c.l.b16 %v494
    %v1268 = vunpack.c.h.b16 %v494
    %v1269 = vunpack.c.l.b16 %v495
    %v1270 = vunpack.c.h.b16 %v495
    %v1271 = vunpack.c.l.b16 %v496
    %v1272 = vunpack.c.h.b16 %v496
    %v1273 = vunpack.c.l.b16 %v497
    %v1274 = vunpack.c.h.b16 %v497
    %v1275 = vunpack.c.l.b16 %v498
    %v1276 = vunpack.c.h.b16 %v498
    %v1277 = vunpack.c.l.b16 %v499
    %v1278 = vunpack.c.h.b16 %v499
    %v1279 = vunpack.c.l.b16 %v500
    %v1280 = vunpack.c.h.b16 %v500
    %v1281 = vunpack.c.l.b16 %v501
    %v1282 = vunpack.c.h.b16 %v501
    %v1283 = vunpack.c.l.b16 %v502
    %v1284 = vunpack.c.h.b16 %v502
    %v1285 = vunpack.c.l.b16 %v503
    %v1286 = vunpack.c.h.b16 %v503
    %v1287 = vunpack.c.l.b16 %v504
    %v1288 = vunpack.c.h.b16 %v504
    %v1289 = vunpack.c.l.b16 %v505
    %v1290 = vunpack.c.h.b16 %v505
    %v1291 = vunpack.c.l.b16 %v506
    %v1292 = vunpack.c.h.b16 %v506
    %v1293 = vunpack.c.l.b16 %v507
    %v1294 = vunpack.c.h.b16 %v507
    %v1295 = vunpack.c.l.b16 %v508
    %v1296 = vunpack.c.h.b16 %v508
    %v1297 = vunpack.c.l.b16 %v509
    %v1298 = vunpack.c.h.b16 %v509
    %v1299 = vunpack.c.l.b16 %v510
    %v1300 = vunpack.c.h.b16 %v510
    %v1301 = vunpack.c.l.b16 %v511
    %v1302 = vunpack.c.h.b16 %v511
    %v1303 = vunpack.c.l.b16 %v512
    %v1304 = vunpack.c.h.b16 %v512
    %v1305 = vunpack.c.l.b16 %v513
    %v1306 = vunpack.c.h.b16 %v513
    %v1307 = vunpack.c.l.b16 %v514
    %v1308 = vunpack.c.h.b16 %v514
    %v1309 = vunpack.c.l.b16 %v515
    %v1310 = vunpack.c.h.b16 %v515
    %v1311 = vunpack.c.l.b16 %v516
    %v1312 = vunpack.c.h.b16 %v516
    %v1313 = vunpack.c.l.b16 %v517
    %v1314 = vunpack.c.h.b16 %v517
    %v1315 = vunpack.c.l.b16 %v518
    %v1316 = vunpack.c.h.b16 %v518
    %v1317 = vunpack.c.l.b16 %v519
    %v1318 = vunpack.c.h.b16 %v519
    %v1319 = vunpack.c.l.b16 %v520
    %v1320 = vunpack.c.h.b16 %v520
    %v1321 = vunpack.c.l.b16 %v521
    %v1322 = vunpack.c.h.b16 %v521
    %v1323 = vunpack.c.l.b16 %v522
    %v1324 = vunpack.c.h.b16 %v522
    %v1325 = vunpack.c.l.b16 %v523
    %v1326 = vunpack.c.h.b16 %v523
    %v1327 = vunpack.c.l.b16 %v524
    %v1328 = vunpack.c.h.b16 %v524
    %v1329 = vunpack.c.l.b16 %v525
    %v1330 = vunpack.c.h.b16 %v525
    %v1331 = vunpack.c.l.b16 %v526
    %v1332 = vunpack.c.h.b16 %v526
    %v1333 = vunpack.c.l.b16 %v527
    %v1334 = vunpack.c.h.b16 %v527
    %v1335 = vunpack.c.l.b16 %v528
    %v1336 = vunpack.c.h.b16 %v528
    %v1337 = vunpack.c.l.b16 %v529
    %v1338 = vunpack.c.h.b16 %v529
    %v1339 = vunpack.c.l.b16 %v530
    %v1340 = vunpack.c.h.b16 %v530
    %v1341 = vpack.c.b16 %v837, %v829
    %v1342 = vpack.c.b16 %v838, %v830
    %v1343 = vpack.c.b16 %v839, %v831
    %v1344 = vpack.c.b16 %v840, %v832
    %v1345 = vpack.c.b16 %v841, %v833
    %v1346 = vpack.c.b16 %v842, %v834
    %v1347 = vpack.c.b16 %v843, %v835
    %v1348 = vpack.c.b16 %v844, %v836
    %v1349 = vpack.c.b16 %v853, %v845
    %v1350 = vpack.c.b16 %v854, %v846
    %v1351 = vpack.c.b16 %v855, %v847
    %v1352 = vpack.c.b16 %v856, %v848
    %v1353 = vpack.c.b16 %v857, %v849
    %v1354 = vpack.c.b16 %v858, %v850
    %v1355 = vpack.c.b16 %v859, %v851
    %v1356 = vpack.c.b16 %v860, %v852
    %v1357 = vpack.c.b16 %v869, %v861
    %v1358 = vpack.c.b16 %v870, %v862
    %v1359 = vpack.c.b16 %v871, %v863
    %v1360 = vpack.c.b16 %v872, %v864
    %v1361 = vpack.c.b16 %v873, %v865
    %v1362 = vpack.c.b16 %v874, %v866
    %v1363 = vpack.c.b16 %v875, %v867
    %v1364 = vpack.c.b16 %v876, %v868
    %v1365 = vpack.c.b16 %v885, %v877
    %v1366 = vpack.c.b16 %v886, %v878
    %v1367 = vpack.c.b16 %v887, %v879
    %v1368 = vpack.c.b16 %v888, %v880
    %v1369 = vpack.c.b16 %v889, %v881
    %v1370 = vpack.c.b16 %v890, %v882
    %v1371 = vpack.c.b16 %v891, %v883
    %v1372 = vpack.c.b16 %v892, %v884
    %v1373 = vpack.c.b16 %v901, %v893
    %v1374 = vpack.c.b16 %v902, %v894
    %v1375 = vpack.c.b16 %v903, %v895
    %v1376 = vpack.c.b16 %v904, %v896
    %v1377 = vpack.c.b16 %v905, %v897
    %v1378 = vpack.c.b16 %v906, %v898
    %v1379 = vpack.c.b16 %v907, %v899
    %v1380 = vpack.c.b16 %v908, %v900
    %v1381 = vpack.c.b16 %v917, %v909
    %v1382 = vpack.c.b16 %v918, %v910
    %v1383 = vpack.c.b16 %v919, %v911
    %v1384 = vpack.c.b16 %v920, %v912
    %v1385 = vpack.c.b16 %v921, %v913
    %v1386 = vpack.c.b16 %v922, %v914
    %v1387 = vpack.c.b16 %v923, %v915
    %v1388 = vpack.c.b16 %v924, %v916
    %v1389 = vpack.c.b16 %v933, %v925
    %v1390 = vpack.c.b16 %v934, %v926
    %v1391 = vpack.c.b16 %v935, %v927
    %v1392 = vpack.c.b16 %v936, %v928
    %v1393 = vpack.c.b16 %v937, %v929
    %v1394 = vpack.c.b16 %v938, %v930
    %v1395 = vpack.c.b16 %v939, %v931
    %v1396 = vpack.c.b16 %v940, %v932
    %v1397 = vpack.c.b16 %v949, %v941
    %v1398 = vpack.c.b16 %v950, %v942
    %v1399 = vpack.c.b16 %v951, %v943
    %v1400 = vpack.c.b16 %v952, %v944
    %v1401 = vpack.c.b16 %v953, %v945
    %v1402 = vpack.c.b16 %v954, %v946
    %v1403 = vpack.c.b16 %v955, %v947
    %v1404 = vpack.c.b16 %v956, %v948
    %v1405 = vpack.c.b16 %v965, %v957
    %v1406 = vpack.c.b16 %v966, %v958
    %v1407 = vpack.c.b16 %v967, %v959
    %v1408 = vpack.c.b16 %v968, %v960
    %v1409 = vpack.c.b16 %v969, %v961
    %v1410 = vpack.c.b16 %v970, %v962
    %v1411 = vpack.c.b16 %v971, %v963
    %v1412 = vpack.c.b16 %v972, %v964
    %v1413 = vpack.c.b16 %v981, %v973
    %v1414 = vpack.c.b16 %v982, %v974
    %v1415 = vpack.c.b16 %v983, %v975
    %v1416 = vpack.c.b16 %v984, %v976
    %v1417 = vpack.c.b16 %v985, %v977
    %v1418 = vpack.c.b16 %v986, %v978
    %v1419 = vpack.c.b16 %v987, %v979
    %v1420 = vpack.c.b16 %v988, %v980
    %v1421 = vpack.c.b16 %v997, %v989
    %v1422 = vpack.c.b16 %v998, %v990
    %v1423 = vpack.c.b16 %v999, %v991
    %v1424 = vpack.c.b16 %v1000, %v992
    %v1425 = vpack.c.b16 %v1001, %v993
    %v1426 = vpack.c.b16 %v1002, %v994
    %v1427 = vpack.c.b16 %v1003, %v995
    %v1428 = vpack.c.b16 %v1004, %v996
    %v1429 = vpack.c.b16 %v1013, %v1005
    %v1430 = vpack.c.b16 %v1014, %v1006
    %v1431 = vpack.c.b16 %v1015, %v1007
    %v1432 = vpack.c.b16 %v1016, %v1008
    %v1433 = vpack.c.b16 %v1017, %v1009
    %v1434 = vpack.c.b16 %v1018, %v1010
    %v1435 = vpack.c.b16 %v1019, %v1011
    %v1436 = vpack.c.b16 %v1020, %v1012
    %v1437 = vpack.c.b16 %v1029, %v1021
    %v1438 = vpack.c.b16 %v1030, %v1022
    %v1439 = vpack.c.b16 %v1031, %v1023
    %v1440 = vpack.c.b16 %v1032, %v1024
    %v1441 = vpack.c.b16 %v1033, %v1025
    %v1442 = vpack.c.b16 %v1034, %v1026
    %v1443 = vpack.c.b16 %v1035, %v1027
    %v1444 = vpack.c.b16 %v1036, %v1028
    %v1445 = vpack.c.b16 %v1045, %v1037
    %v1446 = vpack.c.b16 %v1046, %v1038
    %v1447 = vpack.c.b16 %v1047, %v1039
    %v1448 = vpack.c.b16 %v1048, %v1040
    %v1449 = vpack.c.b16 %v1049, %v1041
    %v1450 = vpack.c.b16 %v1050, %v1042
    %v1451 = vpack.c.b16 %v1051, %v1043
    %v1452 = vpack.c.b16 %v1052, %v1044
    %v1453 = vpack.c.b16 %v1061, %v1053
    %v1454 = vpack.c.b16 %v1062, %v1054
    %v1455 = vpack.c.b16 %v1063, %v1055
    %v1456 = vpack.c.b16 %v1064, %v1056
    %v1457 = vpack.c.b16 %v1065, %v1057
    %v1458 = vpack.c.b16 %v1066, %v1058
    %v1459 = vpack.c.b16 %v1067, %v1059
    %v1460 = vpack.c.b16 %v1068, %v1060
    %v1461 = vpack.c.b16 %v1077, %v1069
    %v1462 = vpack.c.b16 %v1078, %v1070
    %v1463 = vpack.c.b16 %v1079, %v1071
    %v1464 = vpack.c.b16 %v1080, %v1072
    %v1465 = vpack.c.b16 %v1081, %v1073
    %v1466 = vpack.c.b16 %v1082, %v1074
    %v1467 = vpack.c.b16 %v1083, %v1075
    %v1468 = vpack.c.b16 %v1084, %v1076
    %v1469 = vpack.c.b16 %v1093, %v1085
    %v1470 = vpack.c.b16 %v1094, %v1086
    %v1471 = vpack.c.b16 %v1095, %v1087
    %v1472 = vpack.c.b16 %v1096, %v1088
    %v1473 = vpack.c.b16 %v1097, %v1089
    %v1474 = vpack.c.b16 %v1098, %v1090
    %v1475 = vpack.c.b16 %v1099, %v1091
    %v1476 = vpack.c.b16 %v1100, %v1092
    %v1477 = vpack.c.b16 %v1109, %v1101
    %v1478 = vpack.c.b16 %v1110, %v1102
    %v1479 = vpack.c.b16 %v1111, %v1103
    %v1480 = vpack.c.b16 %v1112, %v1104
    %v1481 = vpack.c.b16 %v1113, %v1105
    %v1482 = vpack.c.b16 %v1114, %v1106
    %v1483 = vpack.c.b16 %v1115, %v1107
    %v1484 = vpack.c.b16 %v1116, %v1108
    %v1485 = vpack.c.b16 %v1125, %v1117
    %v1486 = vpack.c.b16 %v1126, %v1118
    %v1487 = vpack.c.b16 %v1127, %v1119
    %v1488 = vpack.c.b16 %v1128, %v1120
    %v1489 = vpack.c.b16 %v1129, %v1121
    %v1490 = vpack.c.b16 %v1130, %v1122
    %v1491 = vpack.c.b16 %v1131, %v1123
    %v1492 = vpack.c.b16 %v1132, %v1124
    %v1493 = vpack.c.b16 %v1141, %v1133
    %v1494 = vpack.c.b16 %v1142, %v1134
    %v1495 = vpack.c.b16 %v1143, %v1135
    %v1496 = vpack.c.b16 %v1144, %v1136
    %v1497 = vpack.c.b16 %v1145, %v1137
    %v1498 = vpack.c.b16 %v1146, %v1138
    %v1499 = vpack.c.b16 %v1147, %v1139
    %v1500 = vpack.c.b16 %v1148, %v1140
    %v1501 = vpack.c.b16 %v1157, %v1149
    %v1502 = vpack.c.b16 %v1158, %v1150
    %v1503 = vpack.c.b16 %v1159, %v1151
    %v1504 = vpack.c.b16 %v1160, %v1152
    %v1505 = vpack.c.b16 %v1161, %v1153
    %v1506 = vpack.c.b16 %v1162, %v1154
    %v1507 = vpack.c.b16 %v1163, %v1155
    %v1508 = vpack.c.b16 %v1164, %v1156
    %v1509 = vpack.c.b16 %v1173, %v1165
    %v1510 = vpack.c.b16 %v1174, %v1166
    %v1511 = vpack.c.b16 %v1175, %v1167
    %v1512 = vpack.c.b16 %v1176, %v1168
    %v1513 = vpack.c.b16 %v1177, %v1169
    %v1514 = vpack.c.b16 %v1178, %v1170
    %v1515 = vpack.c.b16 %v1179, %v1171
    %v1516 = vpack.c.b16 %v1180, %v1172
    %v1517 = vpack.c.b16 %v1189, %v1181
    %v1518 = vpack.c.b16 %v1190, %v1182
    %v1519 = vpack.c.b16 %v1191, %v1183
    %v1520 = vpack.c.b16 %v1192, %v1184
    %v1521 = vpack.c.b16 %v1193, %v1185
    %v1522 = vpack.c.b16 %v1194, %v1186
    %v1523 = vpack.c.b16 %v1195, %v1187
    %v1524 = vpack.c.b16 %v1196, %v1188
    %v1525 = vpack.c.b16 %v1205, %v1197
    %v1526 = vpack.c.b16 %v1206, %v1198
    %v1527 = vpack.c.b16 %v1207, %v1199
    %v1528 = vpack.c.b16 %v1208, %v1200
    %v1529 = vpack.c.b16 %v1209, %v1201
    %v1530 = vpack.c.b16 %v1210, %v1202
    %v1531 = vpack.c.b16 %v1211, %v1203
    %v1532 = vpack.c.b16 %v1212, %v1204
    %v1533 = vpack.c.b16 %v1221, %v1213
    %v1534 = vpack.c.b16 %v1222, %v1214
    %v1535 = vpack.c.b16 %v1223, %v1215
    %v1536 = vpack.c.b16 %v1224, %v1216
    %v1537 = vpack.c.b16 %v1225, %v1217
    %v1538 = vpack.c.b16 %v1226, %v1218
    %v1539 = vpack.c.b16 %v1227, %v1219
    %v1540 = vpack.c.b16 %v1228, %v1220
    %v1541 = vpack.c.b16 %v1237, %v1229
    %v1542 = vpack.c.b16 %v1238, %v1230
    %v1543 = vpack.c.b16 %v1239, %v1231
    %v1544 = vpack.c.b16 %v1240, %v1232
    %v1545 = vpack.c.b16 %v1241, %v1233
    %v1546 = vpack.c.b16 %v1242, %v1234
    %v1547 = vpack.c.b16 %v1243, %v1235
    %v1548 = vpack.c.b16 %v1244, %v1236
    %v1549 = vpack.c.b16 %v1253, %v1245
    %v1550 = vpack.c.b16 %v1254, %v1246
    %v1551 = vpack.c.b16 %v1255, %v1247
    %v1552 = vpack.c.b16 %v1256, %v1248
    %v1553 = vpack.c.b16 %v1257, %v1249
    %v1554 = vpack.c.b16 %v1258, %v1250
    %v1555 = vpack.c.b16 %v1259, %v1251
    %v1556 = vpack.c.b16 %v1260, %v1252
    %v1557 = vpack.c.b16 %v1269, %v1261
    %v1558 = vpack.c.b16 %v1270, %v1262
    %v1559 = vpack.c.b16 %v1271, %v1263
    %v1560 = vpack.c.b16 %v1272, %v1264
    %v1561 = vpack.c.b16 %v1273, %v1265
    %v1562 = vpack.c.b16 %v1274, %v1266
    %v1563 = vpack.c.b16 %v1275, %v1267
    %v1564 = vpack.c.b16 %v1276, %v1268
    %v1565 = vpack.c.b16 %v1285, %v1277
    %v1566 = vpack.c.b16 %v1286, %v1278
    %v1567 = vpack.c.b16 %v1287, %v1279
    %v1568 = vpack.c.b16 %v1288, %v1280
    %v1569 = vpack.c.b16 %v1289, %v1281
    %v1570 = vpack.c.b16 %v1290, %v1282
    %v1571 = vpack.c.b16 %v1291, %v1283
    %v1572 = vpack.c.b16 %v1292, %v1284
    %v1573 = vpack.c.b16 %v1301, %v1293
    %v1574 = vpack.c.b16 %v1302, %v1294
    %v1575 = vpack.c.b16 %v1303, %v1295
    %v1576 = vpack.c.b16 %v1304, %v1296
    %v1577 = vpack.c.b16 %v1305, %v1297
    %v1578 = vpack.c.b16 %v1306, %v1298
    %v1579 = vpack.c.b16 %v1307, %v1299
    %v1580 = vpack.c.b16 %v1308, %v1300
    %v1581 = vpack.c.b16 %v1317, %v1309
    %v1582 = vpack.c.b16 %v1318, %v1310
    %v1583 = vpack.c.b16 %v1319, %v1311
    %v1584 = vpack.c.b16 %v1320, %v1312
    %v1585 = vpack.c.b16 %v1321, %v1313
    %v1586 = vpack.c.b16 %v1322, %v1314
    %v1587 = vpack.c.b16 %v1323, %v1315
    %v1588 = vpack.c.b16 %v1324, %v1316
    %v1589 = vpack.c.b16 %v1333, %v1325
    %v1590 = vpack.c.b16 %v1334, %v1326
    %v1591 = vpack.c.b16 %v1335, %v1327
    %v1592 = vpack.c.b16 %v1336, %v1328
    %v1593 = vpack.c.b16 %v1337, %v1329
    %v1594 = vpack.c.b16 %v1338, %v1330
    %v1595 = vpack.c.b16 %v1339, %v1331
    %v1596 = vpack.c.b16 %v1340, %v1332
    %1853 = vmatprep.subr.bf16.mxu0 %v1342
    %1854 = vmatpush1.bf16.msra.mxu0 %v1341
    %1855 = vmatprep.subr.bf16.mxu0 %v1350
    %1856 = vmatpush1.bf16.msra.mxu0 %v1349
    %1857 = vmatprep.subr.bf16.mxu0 %v1358
    %1858 = vmatpush1.bf16.msra.mxu0 %v1357
    %1859 = vmatprep.subr.bf16.mxu0 %v1366
    %1860 = vmatpush1.bf16.msra.mxu0 %v1365
    %1861 = vmatprep.subr.bf16.mxu0 %v1374
    %1862 = vmatpush1.bf16.msra.mxu0 %v1373
    %1863 = vmatprep.subr.bf16.mxu0 %v1382
    %1864 = vmatpush1.bf16.msra.mxu0 %v1381
    %1865 = vmatprep.subr.bf16.mxu0 %v1390
    %1866 = vmatpush1.bf16.msra.mxu0 %v1389
    %1867 = vmatprep.subr.bf16.mxu0 %v1398
    %1868 = vmatpush1.bf16.msra.mxu0 %v1397
    %1869 = vmatprep.subr.bf16.mxu0 %v1406
    %1870 = vmatpush1.bf16.msra.mxu0 %v1405
    %1871 = vmatprep.subr.bf16.mxu0 %v1414
    %1872 = vmatpush1.bf16.msra.mxu0 %v1413
    %1873 = vmatprep.subr.bf16.mxu0 %v1422
    %1874 = vmatpush1.bf16.msra.mxu0 %v1421
    %1875 = vmatprep.subr.bf16.mxu0 %v1430
    %1876 = vmatpush1.bf16.msra.mxu0 %v1429
    %1877 = vmatprep.subr.bf16.mxu0 %v1438
    %1878 = vmatpush1.bf16.msra.mxu0 %v1437
    %1879 = vmatprep.subr.bf16.mxu0 %v1446
    %1880 = vmatpush1.bf16.msra.mxu0 %v1445
    %1881 = vmatprep.subr.bf16.mxu0 %v1454
    %1882 = vmatpush1.bf16.msra.mxu0 %v1453
    %1883 = vmatprep.subr.bf16.mxu0 %v1462
    %1884 = vmatpush1.bf16.msra.mxu0 %v1461
    %1885 = vmatprep.mubr.bf16.mxu0 %v272
    %1886 = vmatmul.mubr.bf16.gmra.mrb[0].mxu0 %v271
    %v1887 = vpop.f32.mrb[0].mxu0
    %v1888 = vadd.f32 %v536, %v1887
    %v1889 = vpop.f32.mrb[0].mxu0
    %v1890 = vadd.f32 %v540, %v1889
    %v1891 = vpop.f32.mrb[0].mxu0
    %v1892 = vpop.f32.mrb[0].mxu0
    %1893 = vdwg.mxu0
    %1894 = vmatprep.subr.bf16.mxu0 %v1470
    %1895 = vmatpush1.bf16.msra.mxu0 %v1469
    %1896 = vmatprep.subr.bf16.mxu0 %v1478
    %1897 = vmatpush1.bf16.msra.mxu0 %v1477
    %1898 = vmatprep.subr.bf16.mxu0 %v1486
    %1899 = vmatpush1.bf16.msra.mxu0 %v1485
    %1900 = vmatprep.subr.bf16.mxu0 %v1494
    %1901 = vmatpush1.bf16.msra.mxu0 %v1493
    %1902 = vmatprep.subr.bf16.mxu0 %v1502
    %1903 = vmatpush1.bf16.msra.mxu0 %v1501
    %1904 = vmatprep.subr.bf16.mxu0 %v1510
    %1905 = vmatpush1.bf16.msra.mxu0 %v1509
    %1906 = vmatprep.subr.bf16.mxu0 %v1518
    %1907 = vmatpush1.bf16.msra.mxu0 %v1517
    %1908 = vmatprep.subr.bf16.mxu0 %v1526
    %1909 = vmatpush1.bf16.msra.mxu0 %v1525
    %1910 = vmatprep.subr.bf16.mxu0 %v1534
    %1911 = vmatpush1.bf16.msra.mxu0 %v1533
    %1912 = vmatprep.subr.bf16.mxu0 %v1542
    %1913 = vmatpush1.bf16.msra.mxu0 %v1541
    %1914 = vmatprep.subr.bf16.mxu0 %v1550
    %1915 = vmatpush1.bf16.msra.mxu0 %v1549
    %1916 = vmatprep.subr.bf16.mxu0 %v1558
    %1917 = vmatpush1.bf16.msra.mxu0 %v1557
    %1918 = vmatprep.subr.bf16.mxu0 %v1566
    %1919 = vmatpush1.bf16.msra.mxu0 %v1565
    %1920 = vmatprep.subr.bf16.mxu0 %v1574
    %1921 = vmatpush1.bf16.msra.mxu0 %v1573
    %1922 = vmatprep.subr.bf16.mxu0 %v1582
    %1923 = vmatpush1.bf16.msra.mxu0 %v1581
    %1924 = vmatprep.subr.bf16.mxu0 %v1590
    %1925 = vmatpush1.bf16.msra.mxu0 %v1589
    %1926 = vmatprep.mubr.bf16.mxu0 %v274
    %1927 = vmatmul.mubr.bf16.gmra.mrb[0].mxu0 %v273
    %v1928 = vpop.f32.mrb[0].mxu0
    %v1929 = vadd.f32 %v1888, %v1928
    %v1930 = vpop.f32.mrb[0].mxu0
    %v1931 = vadd.f32 %v1890, %v1930
    %v1932 = vpop.f32.mrb[0].mxu0
    %v1933 = vpop.f32.mrb[0].mxu0
    %1934 = vdwg.mxu0
    %1935 = vmatprep.subr.bf16.mxu0 %v1344
    %1936 = vmatpush1.bf16.msra.mxu0 %v1343
    %1937 = vmatprep.subr.bf16.mxu0 %v1352
    %1938 = vmatpush1.bf16.msra.mxu0 %v1351
    %1939 = vmatprep.subr.bf16.mxu0 %v1360
    %1940 = vmatpush1.bf16.msra.mxu0 %v1359
    %1941 = vmatprep.subr.bf16.mxu0 %v1368
    %1942 = vmatpush1.bf16.msra.mxu0 %v1367
    %1943 = vmatprep.subr.bf16.mxu0 %v1376
    %1944 = vmatpush1.bf16.msra.mxu0 %v1375
    %1945 = vmatprep.subr.bf16.mxu0 %v1384
    %1946 = vmatpush1.bf16.msra.mxu0 %v1383
    %1947 = vmatprep.subr.bf16.mxu0 %v1392
    %1948 = vmatpush1.bf16.msra.mxu0 %v1391
    %1949 = vmatprep.subr.bf16.mxu0 %v1400
    %1950 = vmatpush1.bf16.msra.mxu0 %v1399
    %1951 = vmatprep.subr.bf16.mxu0 %v1408
    %1952 = vmatpush1.bf16.msra.mxu0 %v1407
    %1953 = vmatprep.subr.bf16.mxu0 %v1416
    %1954 = vmatpush1.bf16.msra.mxu0 %v1415
    %1955 = vmatprep.subr.bf16.mxu0 %v1424
    %1956 = vmatpush1.bf16.msra.mxu0 %v1423
    %1957 = vmatprep.subr.bf16.mxu0 %v1432
    %1958 = vmatpush1.bf16.msra.mxu0 %v1431
    %1959 = vmatprep.subr.bf16.mxu0 %v1440
    %1960 = vmatpush1.bf16.msra.mxu0 %v1439
    %1961 = vmatprep.subr.bf16.mxu0 %v1448
    %1962 = vmatpush1.bf16.msra.mxu0 %v1447
    %1963 = vmatprep.subr.bf16.mxu0 %v1456
    %1964 = vmatpush1.bf16.msra.mxu0 %v1455
    %1965 = vmatprep.subr.bf16.mxu0 %v1464
    %1966 = vmatpush1.bf16.msra.mxu0 %v1463
    %1967 = vmatprep.mubr.bf16.mxu0 %v272
    %1968 = vmatmul.mubr.bf16.gmra.mrb[0].mxu0 %v271
    %v1969 = vpop.f32.mrb[0].mxu0
    %v1970 = vadd.f32 %v544, %v1969
    %v1971 = vpop.f32.mrb[0].mxu0
    %v1972 = vadd.f32 %v548, %v1971
    %v1973 = vpop.f32.mrb[0].mxu0
    %v1974 = vpop.f32.mrb[0].mxu0
    %1975 = vdwg.mxu0
    %1976 = vmatprep.subr.bf16.mxu0 %v1472
    %1977 = vmatpush1.bf16.msra.mxu0 %v1471
    %1978 = vmatprep.subr.bf16.mxu0 %v1480
    %1979 = vmatpush1.bf16.msra.mxu0 %v1479
    %1980 = vmatprep.subr.bf16.mxu0 %v1488
    %1981 = vmatpush1.bf16.msra.mxu0 %v1487
    %1982 = vmatprep.subr.bf16.mxu0 %v1496
    %1983 = vmatpush1.bf16.msra.mxu0 %v1495
    %1984 = vmatprep.subr.bf16.mxu0 %v1504
    %1985 = vmatpush1.bf16.msra.mxu0 %v1503
    %1986 = vmatprep.subr.bf16.mxu0 %v1512
    %1987 = vmatpush1.bf16.msra.mxu0 %v1511
    %1988 = vmatprep.subr.bf16.mxu0 %v1520
    %1989 = vmatpush1.bf16.msra.mxu0 %v1519
    %1990 = vmatprep.subr.bf16.mxu0 %v1528
    %1991 = vmatpush1.bf16.msra.mxu0 %v1527
    %1992 = vmatprep.subr.bf16.mxu0 %v1536
    %1993 = vmatpush1.bf16.msra.mxu0 %v1535
    %1994 = vmatprep.subr.bf16.mxu0 %v1544
    %1995 = vmatpush1.bf16.msra.mxu0 %v1543
    %1996 = vmatprep.subr.bf16.mxu0 %v1552
    %1997 = vmatpush1.bf16.msra.mxu0 %v1551
    %1998 = vmatprep.subr.bf16.mxu0 %v1560
    %1999 = vmatpush1.bf16.msra.mxu0 %v1559
    %2000 = vmatprep.subr.bf16.mxu0 %v1568
    %2001 = vmatpush1.bf16.msra.mxu0 %v1567
    %2002 = vmatprep.subr.bf16.mxu0 %v1576
    %2003 = vmatpush1.bf16.msra.mxu0 %v1575
    %2004 = vmatprep.subr.bf16.mxu0 %v1584
    %2005 = vmatpush1.bf16.msra.mxu0 %v1583
    %2006 = vmatprep.subr.bf16.mxu0 %v1592
    %2007 = vmatpush1.bf16.msra.mxu0 %v1591
    %2008 = vmatprep.mubr.bf16.mxu0 %v274
    %2009 = vmatmul.mubr.bf16.gmra.mrb[0].mxu0 %v273
    %v2010 = vpop.f32.mrb[0].mxu0
    %v2011 = vadd.f32 %v1970, %v2010
    %v2012 = vpop.f32.mrb[0].mxu0
    %v2013 = vadd.f32 %v1972, %v2012
    %v2014 = vpop.f32.mrb[0].mxu0
    %v2015 = vpop.f32.mrb[0].mxu0
    %2016 = vdwg.mxu0
    %2017 = vmatprep.subr.bf16.mxu0 %v1346
    %2018 = vmatpush1.bf16.msra.mxu0 %v1345
    %2019 = vmatprep.subr.bf16.mxu0 %v1354
    %2020 = vmatpush1.bf16.msra.mxu0 %v1353
    %2021 = vmatprep.subr.bf16.mxu0 %v1362
    %2022 = vmatpush1.bf16.msra.mxu0 %v1361
    %2023 = vmatprep.subr.bf16.mxu0 %v1370
    %2024 = vmatpush1.bf16.msra.mxu0 %v1369
    %2025 = vmatprep.subr.bf16.mxu0 %v1378
    %2026 = vmatpush1.bf16.msra.mxu0 %v1377
    %2027 = vmatprep.subr.bf16.mxu0 %v1386
    %2028 = vmatpush1.bf16.msra.mxu0 %v1385
    %2029 = vmatprep.subr.bf16.mxu0 %v1394
    %2030 = vmatpush1.bf16.msra.mxu0 %v1393
    %2031 = vmatprep.subr.bf16.mxu0 %v1402
    %2032 = vmatpush1.bf16.msra.mxu0 %v1401
    %2033 = vmatprep.subr.bf16.mxu0 %v1410
    %2034 = vmatpush1.bf16.msra.mxu0 %v1409
    %2035 = vmatprep.subr.bf16.mxu0 %v1418
    %2036 = vmatpush1.bf16.msra.mxu0 %v1417
    %2037 = vmatprep.subr.bf16.mxu0 %v1426
    %2038 = vmatpush1.bf16.msra.mxu0 %v1425
    %2039 = vmatprep.subr.bf16.mxu0 %v1434
    %2040 = vmatpush1.bf16.msra.mxu0 %v1433
    %2041 = vmatprep.subr.bf16.mxu0 %v1442
    %2042 = vmatpush1.bf16.msra.mxu0 %v1441
    %2043 = vmatprep.subr.bf16.mxu0 %v1450
    %2044 = vmatpush1.bf16.msra.mxu0 %v1449
    %2045 = vmatprep.subr.bf16.mxu0 %v1458
    %2046 = vmatpush1.bf16.msra.mxu0 %v1457
    %2047 = vmatprep.subr.bf16.mxu0 %v1466
    %2048 = vmatpush1.bf16.msra.mxu0 %v1465
    %2049 = vmatprep.mubr.bf16.mxu0 %v272
    %2050 = vmatmul.mubr.bf16.gmra.mrb[0].mxu0 %v271
    %v2051 = vpop.f32.mrb[0].mxu0
    %v2052 = vadd.f32 %v552, %v2051
    %v2053 = vpop.f32.mrb[0].mxu0
    %v2054 = vadd.f32 %v556, %v2053
    %v2055 = vpop.f32.mrb[0].mxu0
    %v2056 = vpop.f32.mrb[0].mxu0
    %2057 = vdwg.mxu0
    %2058 = vmatprep.subr.bf16.mxu0 %v1474
    %2059 = vmatpush1.bf16.msra.mxu0 %v1473
    %2060 = vmatprep.subr.bf16.mxu0 %v1482
    %2061 = vmatpush1.bf16.msra.mxu0 %v1481
    %2062 = vmatprep.subr.bf16.mxu0 %v1490
    %2063 = vmatpush1.bf16.msra.mxu0 %v1489
    %2064 = vmatprep.subr.bf16.mxu0 %v1498
    %2065 = vmatpush1.bf16.msra.mxu0 %v1497
    %2066 = vmatprep.subr.bf16.mxu0 %v1506
    %2067 = vmatpush1.bf16.msra.mxu0 %v1505
    %2068 = vmatprep.subr.bf16.mxu0 %v1514
    %2069 = vmatpush1.bf16.msra.mxu0 %v1513
    %2070 = vmatprep.subr.bf16.mxu0 %v1522
    %2071 = vmatpush1.bf16.msra.mxu0 %v1521
    %2072 = vmatprep.subr.bf16.mxu0 %v1530
    %2073 = vmatpush1.bf16.msra.mxu0 %v1529
    %2074 = vmatprep.subr.bf16.mxu0 %v1538
    %2075 = vmatpush1.bf16.msra.mxu0 %v1537
    %2076 = vmatprep.subr.bf16.mxu0 %v1546
    %2077 = vmatpush1.bf16.msra.mxu0 %v1545
    %2078 = vmatprep.subr.bf16.mxu0 %v1554
    %2079 = vmatpush1.bf16.msra.mxu0 %v1553
    %2080 = vmatprep.subr.bf16.mxu0 %v1562
    %2081 = vmatpush1.bf16.msra.mxu0 %v1561
    %2082 = vmatprep.subr.bf16.mxu0 %v1570
    %2083 = vmatpush1.bf16.msra.mxu0 %v1569
    %2084 = vmatprep.subr.bf16.mxu0 %v1578
    %2085 = vmatpush1.bf16.msra.mxu0 %v1577
    %2086 = vmatprep.subr.bf16.mxu0 %v1586
    %2087 = vmatpush1.bf16.msra.mxu0 %v1585
    %2088 = vmatprep.subr.bf16.mxu0 %v1594
    %2089 = vmatpush1.bf16.msra.mxu0 %v1593
    %2090 = vmatprep.mubr.bf16.mxu0 %v274
    %2091 = vmatmul.mubr.bf16.gmra.mrb[0].mxu0 %v273
    %v2092 = vpop.f32.mrb[0].mxu0
    %v2093 = vadd.f32 %v2052, %v2092
    %v2094 = vpop.f32.mrb[0].mxu0
    %v2095 = vadd.f32 %v2054, %v2094
    %v2096 = vpop.f32.mrb[0].mxu0
    %v2097 = vpop.f32.mrb[0].mxu0
    %2098 = vdwg.mxu0
    %2099 = vmatprep.subr.bf16.mxu0 %v1348
    %2100 = vmatpush1.bf16.msra.mxu0 %v1347
    %2101 = vmatprep.subr.bf16.mxu0 %v1356
    %2102 = vmatpush1.bf16.msra.mxu0 %v1355
    %2103 = vmatprep.subr.bf16.mxu0 %v1364
    %2104 = vmatpush1.bf16.msra.mxu0 %v1363
    %2105 = vmatprep.subr.bf16.mxu0 %v1372
    %2106 = vmatpush1.bf16.msra.mxu0 %v1371
    %2107 = vmatprep.subr.bf16.mxu0 %v1380
    %2108 = vmatpush1.bf16.msra.mxu0 %v1379
    %2109 = vmatprep.subr.bf16.mxu0 %v1388
    %2110 = vmatpush1.bf16.msra.mxu0 %v1387
    %2111 = vmatprep.subr.bf16.mxu0 %v1396
    %2112 = vmatpush1.bf16.msra.mxu0 %v1395
    %2113 = vmatprep.subr.bf16.mxu0 %v1404
    %2114 = vmatpush1.bf16.msra.mxu0 %v1403
    %2115 = vmatprep.subr.bf16.mxu0 %v1412
    %2116 = vmatpush1.bf16.msra.mxu0 %v1411
    %2117 = vmatprep.subr.bf16.mxu0 %v1420
    %2118 = vmatpush1.bf16.msra.mxu0 %v1419
    %2119 = vmatprep.subr.bf16.mxu0 %v1428
    %2120 = vmatpush1.bf16.msra.mxu0 %v1427
    %2121 = vmatprep.subr.bf16.mxu0 %v1436
    %2122 = vmatpush1.bf16.msra.mxu0 %v1435
    %2123 = vmatprep.subr.bf16.mxu0 %v1444
    %2124 = vmatpush1.bf16.msra.mxu0 %v1443
    %2125 = vmatprep.subr.bf16.mxu0 %v1452
    %2126 = vmatpush1.bf16.msra.mxu0 %v1451
    %2127 = vmatprep.subr.bf16.mxu0 %v1460
    %2128 = vmatpush1.bf16.msra.mxu0 %v1459
    %2129 = vmatprep.subr.bf16.mxu0 %v1468
    %2130 = vmatpush1.bf16.msra.mxu0 %v1467
    %2131 = vmatprep.mubr.bf16.mxu0 %v272
    %2132 = vmatmul.mubr.bf16.gmra.mrb[0].mxu0 %v271
    %v2133 = vpop.f32.mrb[0].mxu0
    %v2134 = vadd.f32 %v560, %v2133
    %v2135 = vpop.f32.mrb[0].mxu0
    %v2136 = vadd.f32 %v564, %v2135
    %v2137 = vpop.f32.mrb[0].mxu0
    %v2138 = vpop.f32.mrb[0].mxu0
    %2139 = vdwg.mxu0
    %2140 = vmatprep.subr.bf16.mxu0 %v1476
    %2141 = vmatpush1.bf16.msra.mxu0 %v1475
    %2142 = vmatprep.subr.bf16.mxu0 %v1484
    %2143 = vmatpush1.bf16.msra.mxu0 %v1483
    %2144 = vmatprep.subr.bf16.mxu0 %v1492
    %2145 = vmatpush1.bf16.msra.mxu0 %v1491
    %2146 = vmatprep.subr.bf16.mxu0 %v1500
    %2147 = vmatpush1.bf16.msra.mxu0 %v1499
    %2148 = vmatprep.subr.bf16.mxu0 %v1508
    %2149 = vmatpush1.bf16.msra.mxu0 %v1507
    %2150 = vmatprep.subr.bf16.mxu0 %v1516
    %2151 = vmatpush1.bf16.msra.mxu0 %v1515
    %2152 = vmatprep.subr.bf16.mxu0 %v1524
    %2153 = vmatpush1.bf16.msra.mxu0 %v1523
    %2154 = vmatprep.subr.bf16.mxu0 %v1532
    %2155 = vmatpush1.bf16.msra.mxu0 %v1531
    %2156 = vmatprep.subr.bf16.mxu0 %v1540
    %2157 = vmatpush1.bf16.msra.mxu0 %v1539
    %2158 = vmatprep.subr.bf16.mxu0 %v1548
    %2159 = vmatpush1.bf16.msra.mxu0 %v1547
    %2160 = vmatprep.subr.bf16.mxu0 %v1556
    %2161 = vmatpush1.bf16.msra.mxu0 %v1555
    %2162 = vmatprep.subr.bf16.mxu0 %v1564
    %2163 = vmatpush1.bf16.msra.mxu0 %v1563
    %2164 = vmatprep.subr.bf16.mxu0 %v1572
    %2165 = vmatpush1.bf16.msra.mxu0 %v1571
    %2166 = vmatprep.subr.bf16.mxu0 %v1580
    %2167 = vmatpush1.bf16.msra.mxu0 %v1579
    %2168 = vmatprep.subr.bf16.mxu0 %v1588
    %2169 = vmatpush1.bf16.msra.mxu0 %v1587
    %2170 = vmatprep.subr.bf16.mxu0 %v1596
    %2171 = vmatpush1.bf16.msra.mxu0 %v1595
    %2172 = vmatprep.mubr.bf16.mxu0 %v274
    %2173 = vmatmul.mubr.bf16.gmra.mrb[0].mxu0 %v273
    %v2174 = vpop.f32.mrb[0].mxu0
    %v2175 = vadd.f32 %v2134, %v2174
    %v2176 = vpop.f32.mrb[0].mxu0
    %v2177 = vadd.f32 %v2136, %v2176
    %v2178 = vpop.f32.mrb[0].mxu0
    %v2179 = vpop.f32.mrb[0].mxu0
    %2180 = vdwg.mxu0
    %v2181 = vxor.u32 %v1929, 2147483648
    %v2182 = vxor.u32 %v1931, 2147483648
    %v2183 = vxor.u32 %v2011, 2147483648
    %v2184 = vxor.u32 %v2013, 2147483648
    %v2185 = vxor.u32 %v2093, 2147483648
    %v2186 = vxor.u32 %v2095, 2147483648
    %v2187 = vxor.u32 %v2175, 2147483648
    %v2188 = vxor.u32 %v2177, 2147483648
    %v2189 = vmul.f32 %v2181, 1.442695
    %v2190 = vpow.pop %v2189
    %v2191 = vmul.f32 %v2182, 1.442695
    %v2192 = vpow.pop %v2191
    %v2193 = vmul.f32 %v2183, 1.442695
    %v2194 = vpow.pop %v2193
    %v2195 = vmul.f32 %v2184, 1.442695
    %v2196 = vpow.pop %v2195
    %v2197 = vmul.f32 %v2185, 1.442695
    %v2198 = vpow.pop %v2197
    %v2199 = vmul.f32 %v2186, 1.442695
    %v2200 = vpow.pop %v2199
    %v2201 = vmul.f32 %v2187, 1.442695
    %v2202 = vpow.pop %v2201
    %v2203 = vmul.f32 %v2188, 1.442695
    %v2204 = vpow.pop %v2203
    %v2205 = vadd.f32 %v2190, 1.0
    %v2206 = vadd.f32 %v2192, 1.0
    %v2207 = vadd.f32 %v2194, 1.0
    %v2208 = vadd.f32 %v2196, 1.0
    %v2209 = vadd.f32 %v2198, 1.0
    %v2210 = vadd.f32 %v2200, 1.0
    %v2211 = vadd.f32 %v2202, 1.0
    %v2212 = vadd.f32 %v2204, 1.0
    %v2213 = vrcp.pop %v2205
    %v2214 = vmul.f32 1.0, %v2213
    %v2215 = vrcp.pop %v2206
    %v2216 = vmul.f32 1.0, %v2215
    %v2217 = vrcp.pop %v2207
    %v2218 = vmul.f32 1.0, %v2217
    %v2219 = vrcp.pop %v2208
    %v2220 = vmul.f32 1.0, %v2219
    %v2221 = vrcp.pop %v2209
    %v2222 = vmul.f32 1.0, %v2221
    %v2223 = vrcp.pop %v2210
    %v2224 = vmul.f32 1.0, %v2223
    %v2225 = vrcp.pop %v2211
    %v2226 = vmul.f32 1.0, %v2225
    %v2227 = vrcp.pop %v2212
    %v2228 = vmul.f32 1.0, %v2227
    %v2237 = vcombine.low %v2214, %v2216
    %v2238 = vcombine.low %v2218, %v2220
    %v2240 = vunpack.c.l.s4 1983009808
    %v2241 = vunpack.c.0.s8 %v2240
    %v2242 = vlaneseq
    %v2243 = vshrl.u32 %v2242, 7
    %v2244 = vsub.s32 %v2241, %v2243
    %v2245 = vrot.slane %v2237, %v2244
    %v2247 = vunpack.c.l.s4 1983009808
    %v2248 = vunpack.c.0.s8 %v2247
    %v2249 = vlaneseq
    %v2250 = vshrl.u32 %v2249, 7
    %v2251 = vsub.s32 %v2248, %v2250
    %v2252 = vrot.slane %v2238, %v2251
    %v2253 = vcombine.low %v2245, %v2252
    %v2254 = vcombine.low %v2222, %v2224
    %v2255 = vcombine.low %v2226, %v2228
    %v2257 = vunpack.c.l.s4 1983009808
    %v2258 = vunpack.c.0.s8 %v2257
    %v2259 = vlaneseq
    %v2260 = vshrl.u32 %v2259, 7
    %v2261 = vsub.s32 %v2258, %v2260
    %v2262 = vrot.slane %v2254, %v2261
    %v2264 = vunpack.c.l.s4 1983009808
    %v2265 = vunpack.c.0.s8 %v2264
    %v2266 = vlaneseq
    %v2267 = vshrl.u32 %v2266, 7
    %v2268 = vsub.s32 %v2265, %v2267
    %v2269 = vrot.slane %v2255, %v2268
    %v2270 = vcombine.low %v2262, %v2269
    %2273 = vst [vmem:[#allocation8] sm:$0xff] %v2253
    %2274 = vst [vmem:[#allocation8 + $0x8] sm:$0xff] %v2270
    // Predicated region
    $region34: #{_forward_impl.1} parent=1 // pred_check
      _
    $region35: #{_forward_impl.1} parent=1 // pred_check_branch
      %2276 = sbr.rel (0) target = $region37
    $region36: #{_forward_impl.1} parent=1 // pred_region
      %s2278 = ssub.s32 256, 256
      %2279 = vsyncadd [#allocation4], %s2278
      %s2281 = sshll.u32 [#allocation8], 4
      %s2282 = int_to_ptr.vmem [resolvable:$true] %s2281
      %2284 = dma.vmem_to_hbm [thread:$0]  %s2282, 256, %s5, [#allocation4]
    $region37: #{_forward_impl.1} parent=1 // pred_fallthru
      _
    // Predicated region
    $region38: #{_forward_impl.1} parent=1 // pred_check
      _
    $region39: #{_forward_impl.1} parent=1 // pred_check_branch
      %2286 = sbr.rel (0) target = $region41
    $region40: #{_forward_impl.1} parent=1 // pred_region
      %2287 = dma.done [#allocation4], 256
    $region41: #{_forward_impl.1} parent=1 // pred_fallthru
      _
    %2288 = vsyncpa [#allocation3], 1
    %2289 = vsyncpa [#allocation6], 1
    %2290 = vsyncpa [#allocation4], 1

</llo_original>
